<compile_context>
chip_gen: v6e
topology: v6e:2x2x1
jax: 0.10.0
libtpu: 0.0.40
codegen_flags: <defaults>
</compile_context>

<pallas_src>
import jax
import jax.numpy as jnp
import numpy as np
from jax.experimental import pallas as pl
from jax.experimental.pallas import tpu as pltpu

LATENT = 4
IMAGE = (16, 16)               # small image_size consistent with the module's ctor arg
FLAT = IMAGE[0] * IMAGE[1]     # 256
HEAD = 2 * LATENT              # fused [mu | logvar] head width (8)
PACKW = 16                     # packed small-output width: [mu(4) | logvar(4) | z(4) | pad(4)]


def _round_up(x, m):
    return (x + m - 1) // m * m


def _choose_tb(batch, tb_max=2048):
    """Batch tile: multiple of 16, <= tb_max, and (when possible) >= 2 grid steps so the
    'parallel' batch axis shards over both v7x TensorCores. ~20 MiB VMEM at tb=2048."""
    tb_max = max(16, (tb_max // 16) * 16)
    if batch <= 16:
        return 16
    half = _round_up((batch + 1) // 2, 16)
    return max(16, min(tb_max, half, _round_up(batch, 16)))


def _vae_kernel(x_ref, eps_ref,
                we1, be1, we2, be2, wmulv, bmulv,
                wd1, bd1, wd2, bd2, wd3, bd3,
                packed_ref, xrec_ref):
    """One batch tile: bf16 MXU matmuls with f32 accumulation, bf16 activations."""
    bf = jnp.bfloat16
    f32 = jnp.float32

    x = x_ref[...].astype(bf)                                         # (TB, FLAT)

    # ---- encode ----
    h2 = jnp.tanh((jnp.dot(x, we1[...], preferred_element_type=f32) + be1[...]).astype(bf))
    h3 = jnp.tanh((jnp.dot(h2, we2[...], preferred_element_type=f32) + be2[...]).astype(bf))
    head = jnp.dot(h3, wmulv[...], preferred_element_type=f32) + bmulv[...]   # (TB, 8)

    mu = head[:, :LATENT]
    logvar = head[:, LATENT:]

    # ---- reparametrize (training mode: z = mu + eps * exp(0.5 * logvar)) ----
    z = eps_ref[...] * jnp.exp(0.5 * logvar) + mu                     # (TB, LATENT) f32

    # ---- decode ----
    # dec_1 has K = LATENT = 4: 4 VPU rank-1 updates instead of an under-filled MXU pass.
    wd1f = wd1[...].astype(f32)                                       # (LATENT, FLAT)
    d1_acc = bd1[...] + z[:, 0:1] * wd1f[0:1, :]
    for j in range(1, LATENT):
        d1_acc = d1_acc + z[:, j:j + 1] * wd1f[j:j + 1, :]
    d1 = jnp.tanh(d1_acc.astype(bf))

    d2 = jnp.tanh((jnp.dot(d1, wd2[...], preferred_element_type=f32) + bd2[...]).astype(bf))
    d3 = jax.nn.sigmoid((jnp.dot(d2, wd3[...], preferred_element_type=f32)
                         + bd3[...]).astype(bf))                      # (TB, FLAT) bf16

    # ---- outputs ----
    # Narrow packed slab: [mu | logvar | z | 0] -> only 64 B/row of HBM traffic.
    packed_ref[:, 0:HEAD] = head
    packed_ref[:, HEAD:HEAD + LATENT] = z
    packed_ref[:, HEAD + LATENT:] = jnp.zeros((head.shape[0], PACKW - HEAD - LATENT), f32)
    xrec_ref[...] = d3                                                # bf16 store


def init_params(key):
    """PyTorch-Linear-style init; weights stored (in, out) in bf16, biases in f32."""
    def linear(k, fan_in, fan_out):
        k1, k2 = jax.random.split(k)
        bound = 1.0 / np.sqrt(fan_in)
        w = jax.random.uniform(k1, (fan_in, fan_out), jnp.float32, -bound, bound)
        b = jax.random.uniform(k2, (1, fan_out), jnp.float32, -bound, bound)
        return w.astype(jnp.bfloat16), b

    keys = jax.random.split(key, 7)
    we1, be1 = linear(keys[0], FLAT, FLAT)      # enc_1
    we2, be2 = linear(keys[1], FLAT, FLAT)      # enc_2
    wmu, bmu = linear(keys[2], FLAT, LATENT)    # enc_mu
    wlv, blv = linear(keys[3], FLAT, LATENT)    # enc_logvar
    wd1, bd1 = linear(keys[4], LATENT, FLAT)    # dec_1
    wd2, bd2 = linear(keys[5], FLAT, FLAT)      # dec_2
    wd3, bd3 = linear(keys[6], FLAT, FLAT)      # dec_3
    return [we1, be1, we2, be2, wmu, bmu, wlv, blv, wd1, bd1, wd2, bd2, wd3, bd3]


def vae_forward(x_nchw, eps, params, perm_key, *, tb=2048):
    (we1, be1, we2, be2, wmu, bmu, wlv, blv,
     wd1, bd1, wd2, bd2, wd3, bd3) = params

    # Fuse the mu/logvar heads into one (FLAT, 8) matmul (tiny, done once per call).
    wmulv = jnp.concatenate([wmu, wlv], axis=1)
    bmulv = jnp.concatenate([bmu, blv], axis=1)

    B = x_nchw.shape[0]
    tb = _choose_tb(B, tb)
    n_blocks = pl.cdiv(B, tb)

    # glue: view(-1, flat_dims). No wrapper pad / cast: f32 x goes straight to the kernel
    # (1 KiB/row of HBM read vs a separate cast pass costing 2 KiB/row total).
    x_flat = x_nchw.reshape(B, FLAT)
    eps_f = eps.astype(jnp.float32)

    def act_spec(d):                       # batch-tiled, double-buffered activations
        return pl.BlockSpec((tb, d), lambda i: (i, 0))

    def const_spec(a):                     # weights/biases: VMEM-resident across the grid
        return pl.BlockSpec(a.shape, lambda i: (0, 0))

    weights = [we1, be1, we2, be2, wmulv, bmulv, wd1, bd1, wd2, bd2, wd3, bd3]
    in_specs = [act_spec(FLAT), act_spec(LATENT)] + [const_spec(a) for a in weights]

    flops = 2 * B * (4 * FLAT * FLAT + FLAT * HEAD + LATENT * FLAT)
    transc = B * (4 * FLAT + LATENT)
    bytes_acc = (sum(int(np.prod(a.shape)) * a.dtype.itemsize for a in weights)
                 + B * FLAT * 4                  # x (f32 in)
                 + B * LATENT * 4                # eps
                 + B * PACKW * 4                 # packed [mu|logvar|z|0] (f32)
                 + B * FLAT * 2)                 # x_recon (bf16)

    packed, xrec_flat = pl.pallas_call(
        _vae_kernel,
        grid=(n_blocks,),
        out_shape=(
            jax.ShapeDtypeStruct((B, PACKW), jnp.float32),
            jax.ShapeDtypeStruct((B, FLAT), jnp.bfloat16),
        ),
        in_specs=in_specs,
        out_specs=(act_spec(PACKW), act_spec(FLAT)),
        compiler_params=pltpu.CompilerParams(dimension_semantics=("parallel",)),
        cost_estimate=pl.CostEstimate(flops=flops, transcendentals=transc,
                                      bytes_accessed=bytes_acc),
    )(x_flat, eps_f, *weights)

    mu = packed[:, :LATENT]
    logvar = packed[:, LATENT:HEAD]
    z = packed[:, HEAD:HEAD + LATENT]
    x_recon = xrec_flat.reshape(B, 1, *IMAGE)     # bf16; compute BCE from logits upstream

    # permutate(z): independent random batch permutation per latent dim (wrapper glue).
    # TODO(synk): uses jax.random instead of torch.randperm, so permutation values differ.
    keys = jax.random.split(perm_key, LATENT)
    perms = jnp.stack([jax.random.permutation(k, B) for k in keys], axis=1)
    z_perm = jnp.take_along_axis(z, perms, axis=0)

    return x_recon, mu, logvar, z, z_perm


def _reference_forward(x_nchw, eps, params):
    """Pure-JAX reference mirroring the kernel's bf16-matmul / bf16-activation math."""
    (we1, be1, we2, be2, wmu, bmu, wlv, blv,
     wd1, bd1, wd2, bd2, wd3, bd3) = params
    bf = jnp.bfloat16

    def mm(a, w, b):
        return jnp.dot(a.astype(bf), w, preferred_element_type=jnp.float32) + b

    B = x_nchw.shape[0]
    x = x_nchw.reshape(B, FLAT)
    h2 = jnp.tanh(mm(x, we1, be1).astype(bf))
    h3 = jnp.tanh(mm(h2, we2, be2).astype(bf))
    mu = mm(h3, wmu, bmu)
    logvar = mm(h3, wlv, blv)
    z = eps * jnp.exp(0.5 * logvar) + mu
    d1 = jnp.tanh((jnp.dot(z, wd1.astype(jnp.float32)) + bd1).astype(bf))
    d2 = jnp.tanh(mm(d1, wd2, bd2).astype(bf))
    d3 = jax.nn.sigmoid(mm(d2, wd3, bd3).astype(bf))
    return d3.astype(jnp.float32).reshape(B, 1, *IMAGE), mu, logvar, z


if __name__ == "__main__":
    key = jax.random.PRNGKey(0)
    k_x, k_eps, k_params, k_perm = jax.random.split(key, 4)

    B = 40                                                        # 2 grid steps + ragged tail
    x = jax.random.uniform(k_x, (B, 1, *IMAGE), jnp.float32)      # NCHW, like PyTorch
    eps = jax.random.normal(k_eps, (B, LATENT), jnp.float32)      # reparam noise
    params = init_params(k_params)

    x_recon, mu, logvar, z, z_perm = vae_forward(x, eps, params, k_perm)
    jax.block_until_ready((x_recon, mu, logvar, z, z_perm))

    # correctness check against a pure-JAX reference (bf16 math -> loose tolerance)
    xr_ref, mu_ref, lv_ref, z_ref = _reference_forward(x, eps, params)
    np.testing.assert_allclose(np.asarray(x_recon.astype(jnp.float32)),
                               np.asarray(xr_ref), rtol=2e-2, atol=2e-2)
    np.testing.assert_allclose(np.asarray(mu), np.asarray(mu_ref), rtol=2e-2, atol=2e-2)
    np.testing.assert_allclose(np.asarray(logvar), np.asarray(lv_ref), rtol=2e-2, atol=2e-2)
    np.testing.assert_allclose(np.asarray(z), np.asarray(z_ref), rtol=2e-2, atol=2e-2)
    assert x_recon.shape == (B, 1, *IMAGE) and x_recon.dtype == jnp.bfloat16
    assert z_perm.shape == (B, LATENT)

    print("KERNEL_OK")
</pallas_src>

<mosaic_0001>
module attributes {stable_mosaic.version = 11 : i64} {
  func.func @_vae_kernel(%arg0: i32, %arg1: memref<32x256xf32, #tpu.memory_space<vmem>>, %arg2: memref<32x4xf32, #tpu.memory_space<vmem>>, %arg3: memref<256x256xbf16, #tpu.memory_space<vmem>>, %arg4: memref<1x256xf32, #tpu.memory_space<vmem>>, %arg5: memref<256x256xbf16, #tpu.memory_space<vmem>>, %arg6: memref<1x256xf32, #tpu.memory_space<vmem>>, %arg7: memref<256x8xbf16, #tpu.memory_space<vmem>>, %arg8: memref<1x8xf32, #tpu.memory_space<vmem>>, %arg9: memref<4x256xbf16, #tpu.memory_space<vmem>>, %arg10: memref<1x256xf32, #tpu.memory_space<vmem>>, %arg11: memref<256x256xbf16, #tpu.memory_space<vmem>>, %arg12: memref<1x256xf32, #tpu.memory_space<vmem>>, %arg13: memref<256x256xbf16, #tpu.memory_space<vmem>>, %arg14: memref<1x256xf32, #tpu.memory_space<vmem>>, %arg15: memref<32x16xf32, #tpu.memory_space<vmem>>, %arg16: memref<32x256xbf16, #tpu.memory_space<vmem>>) attributes {dimension_semantics = [#tpu.dimension_semantics<parallel>], iteration_bounds = array<i64: 2>, scalar_prefetch = 0 : i64, scratch_operands = 0 : i64, tpu.core_type = #tpu.core_type<tc>, window_params = [{transform_indices = @transform_0, window_bounds = array<i64: 32, 256>}, {transform_indices = @transform_1, window_bounds = array<i64: 32, 4>}, {pipeline_mode = #tpu.pipeline_mode<synchronous>, transform_indices = @transform_2, window_bounds = array<i64: 256, 256>}, {pipeline_mode = #tpu.pipeline_mode<synchronous>, transform_indices = @transform_3, window_bounds = array<i64: 1, 256>}, {pipeline_mode = #tpu.pipeline_mode<synchronous>, transform_indices = @transform_4, window_bounds = array<i64: 256, 256>}, {pipeline_mode = #tpu.pipeline_mode<synchronous>, transform_indices = @transform_5, window_bounds = array<i64: 1, 256>}, {pipeline_mode = #tpu.pipeline_mode<synchronous>, transform_indices = @transform_6, window_bounds = array<i64: 256, 8>}, {pipeline_mode = #tpu.pipeline_mode<synchronous>, transform_indices = @transform_7, window_bounds = array<i64: 1, 8>}, {pipeline_mode = #tpu.pipeline_mode<synchronous>, transform_indices = @transform_8, window_bounds = array<i64: 4, 256>}, {pipeline_mode = #tpu.pipeline_mode<synchronous>, transform_indices = @transform_9, window_bounds = array<i64: 1, 256>}, {pipeline_mode = #tpu.pipeline_mode<synchronous>, transform_indices = @transform_10, window_bounds = array<i64: 256, 256>}, {pipeline_mode = #tpu.pipeline_mode<synchronous>, transform_indices = @transform_11, window_bounds = array<i64: 1, 256>}, {pipeline_mode = #tpu.pipeline_mode<synchronous>, transform_indices = @transform_12, window_bounds = array<i64: 256, 256>}, {pipeline_mode = #tpu.pipeline_mode<synchronous>, transform_indices = @transform_13, window_bounds = array<i64: 1, 256>}, {transform_indices = @transform_14, window_bounds = array<i64: 32, 16>}, {transform_indices = @transform_15, window_bounds = array<i64: 32, 256>}]} {
    %c0 = arith.constant 0 : index
    %c0_0 = arith.constant 0 : index
    %0 = vector.load %arg1[%c0, %c0_0] : memref<32x256xf32, #tpu.memory_space<vmem>>, vector<32x256xf32>
    %1 = arith.truncf %0 : vector<32x256xf32> to vector<32x256xbf16>
    %c0_1 = arith.constant 0 : index
    %c0_2 = arith.constant 0 : index
    %2 = vector.load %arg3[%c0_1, %c0_2] : memref<256x256xbf16, #tpu.memory_space<vmem>>, vector<256x256xbf16>
    %cst = arith.constant dense<0.000000e+00> : vector<32x256xf32>
    %3 = tpu.matmul %1, %2, %cst {dimension_numbers = #tpu.dot_dimension_numbers<[1], [0], [0], [1], [0, 0, 1, 1], [], []>} : vector<32x256xbf16>, vector<256x256xbf16>, vector<32x256xf32> -> vector<32x256xf32>
    %c0_3 = arith.constant 0 : index
    %c0_4 = arith.constant 0 : index
    %4 = vector.load %arg4[%c0_3, %c0_4] : memref<1x256xf32, #tpu.memory_space<vmem>>, vector<1x256xf32>
    %5 = vector.broadcast %4 : vector<1x256xf32> to vector<32x256xf32>
    %6 = arith.addf %3, %5 : vector<32x256xf32>
    %7 = arith.truncf %6 : vector<32x256xf32> to vector<32x256xbf16>
    %8 = math.tanh %7 : vector<32x256xbf16>
    %c0_5 = arith.constant 0 : index
    %c0_6 = arith.constant 0 : index
    %9 = vector.load %arg5[%c0_5, %c0_6] : memref<256x256xbf16, #tpu.memory_space<vmem>>, vector<256x256xbf16>
    %cst_7 = arith.constant dense<0.000000e+00> : vector<32x256xf32>
    %10 = tpu.matmul %8, %9, %cst_7 {dimension_numbers = #tpu.dot_dimension_numbers<[1], [0], [0], [1], [0, 0, 1, 1], [], []>} : vector<32x256xbf16>, vector<256x256xbf16>, vector<32x256xf32> -> vector<32x256xf32>
    %c0_8 = arith.constant 0 : index
    %c0_9 = arith.constant 0 : index
    %11 = vector.load %arg6[%c0_8, %c0_9] : memref<1x256xf32, #tpu.memory_space<vmem>>, vector<1x256xf32>
    %12 = vector.broadcast %11 : vector<1x256xf32> to vector<32x256xf32>
    %13 = arith.addf %10, %12 : vector<32x256xf32>
    %14 = arith.truncf %13 : vector<32x256xf32> to vector<32x256xbf16>
    %15 = math.tanh %14 : vector<32x256xbf16>
    %c0_10 = arith.constant 0 : index
    %c0_11 = arith.constant 0 : index
    %16 = vector.load %arg7[%c0_10, %c0_11] : memref<256x8xbf16, #tpu.memory_space<vmem>>, vector<256x8xbf16>
    %cst_12 = arith.constant dense<0.000000e+00> : vector<32x8xf32>
    %17 = tpu.matmul %15, %16, %cst_12 {dimension_numbers = #tpu.dot_dimension_numbers<[1], [0], [0], [1], [0, 0, 1, 1], [], []>} : vector<32x256xbf16>, vector<256x8xbf16>, vector<32x8xf32> -> vector<32x8xf32>
    %c0_13 = arith.constant 0 : index
    %c0_14 = arith.constant 0 : index
    %18 = vector.load %arg8[%c0_13, %c0_14] : memref<1x8xf32, #tpu.memory_space<vmem>>, vector<1x8xf32>
    %19 = vector.broadcast %18 : vector<1x8xf32> to vector<32x8xf32>
    %20 = arith.addf %17, %19 : vector<32x8xf32>
    %21 = vector.extract_strided_slice %20 {offsets = [0, 0], sizes = [32, 4], strides = [1, 1]} : vector<32x8xf32> to vector<32x4xf32>
    %22 = vector.extract_strided_slice %20 {offsets = [0, 4], sizes = [32, 4], strides = [1, 1]} : vector<32x8xf32> to vector<32x4xf32>
    %c0_15 = arith.constant 0 : index
    %c0_16 = arith.constant 0 : index
    %23 = vector.load %arg2[%c0_15, %c0_16] : memref<32x4xf32, #tpu.memory_space<vmem>>, vector<32x4xf32>
    %cst_17 = arith.constant 5.000000e-01 : f32
    %24 = vector.broadcast %cst_17 : f32 to vector<32x4xf32>
    %25 = arith.mulf %24, %22 : vector<32x4xf32>
    %26 = math.exp %25 : vector<32x4xf32>
    %27 = arith.mulf %23, %26 : vector<32x4xf32>
    %28 = arith.addf %27, %21 : vector<32x4xf32>
    %c0_18 = arith.constant 0 : index
    %c0_19 = arith.constant 0 : index
    %29 = vector.load %arg9[%c0_18, %c0_19] : memref<4x256xbf16, #tpu.memory_space<vmem>>, vector<4x256xbf16>
    %30 = arith.extf %29 : vector<4x256xbf16> to vector<4x256xf32>
    %c0_20 = arith.constant 0 : index
    %c0_21 = arith.constant 0 : index
    %31 = vector.load %arg10[%c0_20, %c0_21] : memref<1x256xf32, #tpu.memory_space<vmem>>, vector<1x256xf32>
    %32 = vector.extract_strided_slice %28 {offsets = [0, 0], sizes = [32, 1], strides = [1, 1]} : vector<32x4xf32> to vector<32x1xf32>
    %33 = vector.extract_strided_slice %30 {offsets = [0, 0], sizes = [1, 256], strides = [1, 1]} : vector<4x256xf32> to vector<1x256xf32>
    %34 = vector.broadcast %32 : vector<32x1xf32> to vector<32x256xf32>
    %35 = vector.broadcast %33 : vector<1x256xf32> to vector<32x256xf32>
    %36 = arith.mulf %34, %35 : vector<32x256xf32>
    %37 = vector.broadcast %31 : vector<1x256xf32> to vector<32x256xf32>
    %38 = arith.addf %37, %36 : vector<32x256xf32>
    %39 = vector.extract_strided_slice %28 {offsets = [0, 1], sizes = [32, 1], strides = [1, 1]} : vector<32x4xf32> to vector<32x1xf32>
    %40 = vector.extract_strided_slice %30 {offsets = [1, 0], sizes = [1, 256], strides = [1, 1]} : vector<4x256xf32> to vector<1x256xf32>
    %41 = vector.broadcast %39 : vector<32x1xf32> to vector<32x256xf32>
    %42 = vector.broadcast %40 : vector<1x256xf32> to vector<32x256xf32>
    %43 = arith.mulf %41, %42 : vector<32x256xf32>
    %44 = arith.addf %38, %43 : vector<32x256xf32>
    %45 = vector.extract_strided_slice %28 {offsets = [0, 2], sizes = [32, 1], strides = [1, 1]} : vector<32x4xf32> to vector<32x1xf32>
    %46 = vector.extract_strided_slice %30 {offsets = [2, 0], sizes = [1, 256], strides = [1, 1]} : vector<4x256xf32> to vector<1x256xf32>
    %47 = vector.broadcast %45 : vector<32x1xf32> to vector<32x256xf32>
    %48 = vector.broadcast %46 : vector<1x256xf32> to vector<32x256xf32>
    %49 = arith.mulf %47, %48 : vector<32x256xf32>
    %50 = arith.addf %44, %49 : vector<32x256xf32>
    %51 = vector.extract_strided_slice %28 {offsets = [0, 3], sizes = [32, 1], strides = [1, 1]} : vector<32x4xf32> to vector<32x1xf32>
    %52 = vector.extract_strided_slice %30 {offsets = [3, 0], sizes = [1, 256], strides = [1, 1]} : vector<4x256xf32> to vector<1x256xf32>
    %53 = vector.broadcast %51 : vector<32x1xf32> to vector<32x256xf32>
    %54 = vector.broadcast %52 : vector<1x256xf32> to vector<32x256xf32>
    %55 = arith.mulf %53, %54 : vector<32x256xf32>
    %56 = arith.addf %50, %55 : vector<32x256xf32>
    %57 = arith.truncf %56 : vector<32x256xf32> to vector<32x256xbf16>
    %58 = math.tanh %57 : vector<32x256xbf16>
    %c0_22 = arith.constant 0 : index
    %c0_23 = arith.constant 0 : index
    %59 = vector.load %arg11[%c0_22, %c0_23] : memref<256x256xbf16, #tpu.memory_space<vmem>>, vector<256x256xbf16>
    %cst_24 = arith.constant dense<0.000000e+00> : vector<32x256xf32>
    %60 = tpu.matmul %58, %59, %cst_24 {dimension_numbers = #tpu.dot_dimension_numbers<[1], [0], [0], [1], [0, 0, 1, 1], [], []>} : vector<32x256xbf16>, vector<256x256xbf16>, vector<32x256xf32> -> vector<32x256xf32>
    %c0_25 = arith.constant 0 : index
    %c0_26 = arith.constant 0 : index
    %61 = vector.load %arg12[%c0_25, %c0_26] : memref<1x256xf32, #tpu.memory_space<vmem>>, vector<1x256xf32>
    %62 = vector.broadcast %61 : vector<1x256xf32> to vector<32x256xf32>
    %63 = arith.addf %60, %62 : vector<32x256xf32>
    %64 = arith.truncf %63 : vector<32x256xf32> to vector<32x256xbf16>
    %65 = math.tanh %64 : vector<32x256xbf16>
    %c0_27 = arith.constant 0 : index
    %c0_28 = arith.constant 0 : index
    %66 = vector.load %arg13[%c0_27, %c0_28] : memref<256x256xbf16, #tpu.memory_space<vmem>>, vector<256x256xbf16>
    %cst_29 = arith.constant dense<0.000000e+00> : vector<32x256xf32>
    %67 = tpu.matmul %65, %66, %cst_29 {dimension_numbers = #tpu.dot_dimension_numbers<[1], [0], [0], [1], [0, 0, 1, 1], [], []>} : vector<32x256xbf16>, vector<256x256xbf16>, vector<32x256xf32> -> vector<32x256xf32>
    %c0_30 = arith.constant 0 : index
    %c0_31 = arith.constant 0 : index
    %68 = vector.load %arg14[%c0_30, %c0_31] : memref<1x256xf32, #tpu.memory_space<vmem>>, vector<1x256xf32>
    %69 = vector.broadcast %68 : vector<1x256xf32> to vector<32x256xf32>
    %70 = arith.addf %67, %69 : vector<32x256xf32>
    %71 = arith.truncf %70 : vector<32x256xf32> to vector<32x256xbf16>
    %72 = arith.negf %71 : vector<32x256xbf16>
    %73 = math.exp %72 : vector<32x256xbf16>
    %cst_32 = arith.constant 1.000000e+00 : bf16
    %74 = vector.broadcast %cst_32 : bf16 to vector<32x256xbf16>
    %75 = arith.addf %74, %73 : vector<32x256xbf16>
    %76 = arith.divf %74, %75 : vector<32x256xbf16>
    %c0_33 = arith.constant 0 : index
    %c0_34 = arith.constant 0 : index
    %77 = vector.load %arg15[%c0_33, %c0_34] : memref<32x16xf32, #tpu.memory_space<vmem>>, vector<32x8xf32>
    tpu.vector_store %arg15[%c0_33, %c0_34], %20 {strides = array<i32>} : memref<32x16xf32, #tpu.memory_space<vmem>>, vector<32x8xf32>,
    %c0_35 = arith.constant 0 : index
    %c8 = arith.constant 8 : index
    %78 = vector.load %arg15[%c0_35, %c8] : memref<32x16xf32, #tpu.memory_space<vmem>>, vector<32x4xf32>
    tpu.vector_store %arg15[%c0_35, %c8], %28 {strides = array<i32>} : memref<32x16xf32, #tpu.memory_space<vmem>>, vector<32x4xf32>,
    %cst_36 = arith.constant 0.000000e+00 : f32
    %79 = vector.broadcast %cst_36 : f32 to vector<32x4xf32>
    %c0_37 = arith.constant 0 : index
    %c12 = arith.constant 12 : index
    %80 = vector.load %arg15[%c0_37, %c12] : memref<32x16xf32, #tpu.memory_space<vmem>>, vector<32x4xf32>
    tpu.vector_store %arg15[%c0_37, %c12], %79 {strides = array<i32>} : memref<32x16xf32, #tpu.memory_space<vmem>>, vector<32x4xf32>,
    %c0_38 = arith.constant 0 : index
    %c0_39 = arith.constant 0 : index
    %81 = vector.load %arg16[%c0_38, %c0_39] : memref<32x256xbf16, #tpu.memory_space<vmem>>, vector<32x256xbf16>
    tpu.vector_store %arg16[%c0_38, %c0_39], %76 {strides = array<i32>} : memref<32x256xbf16, #tpu.memory_space<vmem>>, vector<32x256xbf16>,
    return
  }
  func.func @transform_0(%arg0: i32) -> (i32, i32) {
    %c0_i32 = arith.constant 0 : i32
    %c0_i32_0 = arith.constant 0 : i32
    return %arg0, %c0_i32 : i32, i32
  }
  func.func @transform_1(%arg0: i32) -> (i32, i32) {
    %c0_i32 = arith.constant 0 : i32
    %c0_i32_0 = arith.constant 0 : i32
    return %arg0, %c0_i32 : i32, i32
  }
  func.func @transform_2(%arg0: i32) -> (i32, i32) {
    %c0_i32 = arith.constant 0 : i32
    %c0_i32_0 = arith.constant 0 : i32
    %c0_i32_1 = arith.constant 0 : i32
    return %c0_i32, %c0_i32_0 : i32, i32
  }
  func.func @transform_3(%arg0: i32) -> (i32, i32) {
    %c0_i32 = arith.constant 0 : i32
    %c0_i32_0 = arith.constant 0 : i32
    %c0_i32_1 = arith.constant 0 : i32
    return %c0_i32, %c0_i32_0 : i32, i32
  }
  func.func @transform_4(%arg0: i32) -> (i32, i32) {
    %c0_i32 = arith.constant 0 : i32
    %c0_i32_0 = arith.constant 0 : i32
    %c0_i32_1 = arith.constant 0 : i32
    return %c0_i32, %c0_i32_0 : i32, i32
  }
  func.func @transform_5(%arg0: i32) -> (i32, i32) {
    %c0_i32 = arith.constant 0 : i32
    %c0_i32_0 = arith.constant 0 : i32
    %c0_i32_1 = arith.constant 0 : i32
    return %c0_i32, %c0_i32_0 : i32, i32
  }
  func.func @transform_6(%arg0: i32) -> (i32, i32) {
    %c0_i32 = arith.constant 0 : i32
    %c0_i32_0 = arith.constant 0 : i32
    %c0_i32_1 = arith.constant 0 : i32
    return %c0_i32, %c0_i32_0 : i32, i32
  }
  func.func @transform_7(%arg0: i32) -> (i32, i32) {
    %c0_i32 = arith.constant 0 : i32
    %c0_i32_0 = arith.constant 0 : i32
    %c0_i32_1 = arith.constant 0 : i32
    return %c0_i32, %c0_i32_0 : i32, i32
  }
  func.func @transform_8(%arg0: i32) -> (i32, i32) {
    %c0_i32 = arith.constant 0 : i32
    %c0_i32_0 = arith.constant 0 : i32
    %c0_i32_1 = arith.constant 0 : i32
    return %c0_i32, %c0_i32_0 : i32, i32
  }
  func.func @transform_9(%arg0: i32) -> (i32, i32) {
    %c0_i32 = arith.constant 0 : i32
    %c0_i32_0 = arith.constant 0 : i32
    %c0_i32_1 = arith.constant 0 : i32
    return %c0_i32, %c0_i32_0 : i32, i32
  }
  func.func @transform_10(%arg0: i32) -> (i32, i32) {
    %c0_i32 = arith.constant 0 : i32
    %c0_i32_0 = arith.constant 0 : i32
    %c0_i32_1 = arith.constant 0 : i32
    return %c0_i32, %c0_i32_0 : i32, i32
  }
  func.func @transform_11(%arg0: i32) -> (i32, i32) {
    %c0_i32 = arith.constant 0 : i32
    %c0_i32_0 = arith.constant 0 : i32
    %c0_i32_1 = arith.constant 0 : i32
    return %c0_i32, %c0_i32_0 : i32, i32
  }
  func.func @transform_12(%arg0: i32) -> (i32, i32) {
    %c0_i32 = arith.constant 0 : i32
    %c0_i32_0 = arith.constant 0 : i32
    %c0_i32_1 = arith.constant 0 : i32
    return %c0_i32, %c0_i32_0 : i32, i32
  }
  func.func @transform_13(%arg0: i32) -> (i32, i32) {
    %c0_i32 = arith.constant 0 : i32
    %c0_i32_0 = arith.constant 0 : i32
    %c0_i32_1 = arith.constant 0 : i32
    return %c0_i32, %c0_i32_0 : i32, i32
  }
  func.func @transform_14(%arg0: i32) -> (i32, i32) {
    %c0_i32 = arith.constant 0 : i32
    %c0_i32_0 = arith.constant 0 : i32
    return %arg0, %c0_i32 : i32, i32
  }
  func.func @transform_15(%arg0: i32) -> (i32, i32) {
    %c0_i32 = arith.constant 0 : i32
    %c0_i32_0 = arith.constant 0 : i32
    return %arg0, %c0_i32 : i32, i32
  }
}

</mosaic_0001>

<llo_original>
// kernel: tpu_custom_call.1
$region0: #{tpu_custom_call.1}
  #allocation0 [shape = 'u32[]', space=smem, size = 0x4, offset = 0x4, fixed_abs, tag = 'smem constant byte address 0x4 - core index']
  #allocation1 [shape = 'u32[144,128]{1,0:T(1,128)}', space=vmem, size = 0x12000, scoped, tag = 'internal scratch']
  %s0 = inlined_call_operand.vmem [shape: f32[40,256], index: 0, kind: input, shape index: {}]
  %s1 = inlined_call_operand.vmem [shape: f32[40,4], index: 1, kind: input, shape index: {}]
  %s2 = inlined_call_operand.hbm [shape: bf16[256,256], index: 2, kind: input, shape index: {}]
  %s3 = inlined_call_operand.vmem [shape: f32[1,256], index: 3, kind: input, shape index: {}]
  %s4 = inlined_call_operand.hbm [shape: bf16[256,256], index: 4, kind: input, shape index: {}]
  %s5 = inlined_call_operand.vmem [shape: f32[1,256], index: 5, kind: input, shape index: {}]
  %s6 = inlined_call_operand.vmem [shape: bf16[256,8], index: 6, kind: input, shape index: {}]
  %s7 = inlined_call_operand.vmem [shape: f32[1,8], index: 7, kind: input, shape index: {}]
  %s8 = inlined_call_operand.vmem [shape: bf16[4,256], index: 8, kind: input, shape index: {}]
  %s9 = inlined_call_operand.vmem [shape: f32[1,256], index: 9, kind: input, shape index: {}]
  %s10 = inlined_call_operand.hbm [shape: bf16[256,256], index: 10, kind: input, shape index: {}]
  %s11 = inlined_call_operand.vmem [shape: f32[1,256], index: 11, kind: input, shape index: {}]
  %s12 = inlined_call_operand.hbm [shape: bf16[256,256], index: 12, kind: input, shape index: {}]
  %s13 = inlined_call_operand.vmem [shape: f32[1,256], index: 13, kind: input, shape index: {}]
  %s14 = inlined_call_operand.vmem [shape: f32[40,16], index: 14, kind: output, shape index: {0}]
  %s15 = inlined_call_operand.hbm [shape: bf16[40,256], index: 15, kind: output, shape index: {1}]
  %16 = xla_tuple %s14, %s15
  %s17 = sld [smem:[#allocation0]]
  $region161: #{tpu_custom_call.1} parent=0
    _
  %s19 = ssub.s32 1, %s17
  %s20 = scalar_select 0, %s19, %s17
  $region1: #{tpu_custom_call.1} parent=0
    #allocation2 [shape = 'u8[131072]{0}', space=vmem, size = 0x20000, scoped, tag = 'input window, operand 2, single buffered']
    #allocation3 [shape = 's32[2]{0}', space=sflag, size = 0x8, scoped, tag = 'scoped memory for tpu_custom_call.1']
    #allocation4 [shape = 's32[2]{0}', space=sflag, size = 0x8, scoped, tag = 'scoped memory for tpu_custom_call.1']
    #allocation5 [shape = 'u8[131072]{0}', space=vmem, size = 0x20000, scoped, tag = 'input window, operand 4, single buffered']
    #allocation6 [shape = 's32[1]{0}', space=sflag, size = 0x4, scoped, tag = 'scoped memory for tpu_custom_call.1']
    #allocation7 [shape = 'u8[131072]{0}', space=vmem, size = 0x20000, scoped, tag = 'input window, operand 10, single buffered']
    #allocation8 [shape = 'u8[131072]{0}', space=vmem, size = 0x20000, scoped, tag = 'input window, operand 12, single buffered']
    #allocation9 [shape = 's32[1]{0}', space=sflag, size = 0x4, scoped, tag = 'scoped memory for tpu_custom_call.1']
    #allocation10 [shape = 'u8[32768]{0}', space=vmem, size = 0x8000, scoped, tag = 'output window, operand 0']
    #allocation11 [shape = 'u8[32768]{0}', space=vmem, size = 0x8000, scoped, tag = 'output window, operand 1']
    %21 = vsyncpa [#allocation3], 0
    %22 = vsyncpa [#allocation6], 0
    %23 = vsyncpa [#allocation9], 0
    %24 = vsyncpa [#allocation4], 0
    %s25 = scalar_lea.sflag [#allocation4], 1
    %26 = vsyncpa %s25, 0
    loop: start=0, step=1, limit=4
    $region2: #{tpu_custom_call.1} parent=1 // loop_pre_header
      _
    $region3: #{tpu_custom_call.1} parent=1 // loop_header
      %s28 = sphi 0, %s32
      %p29 = scmp.ge.s32.totalorder %s28, 4
      %s38 = sphi 0, %s40
      %s41 = sphi 0, %s38
      %s42 = sphi 0, %s41
      %s58 = sphi 0, %s42
      %s64 = sphi 0, %s66
      %s67 = sphi 0, %s64
      %s68 = sphi 0, %s67
      %s84 = sphi 0, %s68
      %s88 = sphi 0, %s88
      %s90 = sphi 0, %s88
      %s91 = sphi 0, %s90
      %s105 = sphi 0, %s91
      %s109 = sphi 0, %s109
      %s111 = sphi 0, %s109
      %s112 = sphi 0, %s111
      %s126 = sphi 0, %s112
      %s130 = sphi 0, %s130
      %s132 = sphi 0, %s130
      %s133 = sphi 0, %s132
      %s147 = sphi 0, %s133
      %s151 = sphi 0, %s151
      %s153 = sphi 0, %s151
      %s154 = sphi 0, %s153
      %s168 = sphi 0, %s154
      %s172 = sphi 0, %s172
      %s174 = sphi 0, %s172
      %s175 = sphi 0, %s174
      %s189 = sphi 0, %s175
      %s193 = sphi 0, %s193
      %s195 = sphi 0, %s193
      %s196 = sphi 0, %s195
      %s210 = sphi 0, %s196
      %s214 = sphi 0, %s214
      %s216 = sphi 0, %s214
      %s217 = sphi 0, %s216
      %s231 = sphi 0, %s217
      %s235 = sphi 0, %s235
      %s237 = sphi 0, %s235
      %s238 = sphi 0, %s237
      %s252 = sphi 0, %s238
      %s256 = sphi 0, %s256
      %s258 = sphi 0, %s256
      %s259 = sphi 0, %s258
      %s273 = sphi 0, %s259
      %s277 = sphi 0, %s277
      %s279 = sphi 0, %s277
      %s280 = sphi 0, %s279
      %s294 = sphi 0, %s280
      %s298 = sphi 0, %s298
      %s300 = sphi 0, %s298
      %s301 = sphi 0, %s300
      %s315 = sphi 0, %s301
      %s319 = sphi 0, %s319
      %s321 = sphi 0, %s319
      %s322 = sphi 0, %s321
      %s336 = sphi 0, %s322
      %s342 = sphi 0, %s344
      %s345 = sphi 0, %s342
      %s346 = sphi 0, %s345
      %s362 = sphi 0, %s346
      %s368 = sphi 0, %s370
      %s371 = sphi 0, %s368
      %s372 = sphi 0, %s371
      %s388 = sphi 0, %s372
    $region4: #{tpu_custom_call.1} parent=1 // loop_header_branch
      %31 = sbr.rel (%p29) target = $region8
    $region5: #{tpu_custom_call.1} parent=1 // loop_body
      %s33 = ssub.s32 %s28, 1
      %s34 = ssub.s32 %s28, 2
      %s35 = sadd.s32 %s28, 1
      %s36 = ssub.s32 %s28, %s35
      %p37 = scmp.eq.s32.totalorder %s36, 0
      %s39 = sadd.s32 %s38, 1
      %s40 = scalar_select %p37, %s38, %s39
      %p43 = pneg %p37
      %p44 = scmp.eq.s32.totalorder %s28, 1
      %p45 = por %p43, %p44
      %p46 = scmp.ne.s32.totalorder %s38, %s41
      %p47 = scmp.eq.s32.totalorder %s28, 0
      %p48 = por %p46, %p47
      %p49 = scmp.ne.s32.totalorder %s38, %s41
      %p50 = scmp.eq.s32.totalorder %s33, 1
      %p51 = por %p49, %p50
      %p52 = scmp.ne.s32.totalorder %s41, %s42
      %p53 = scmp.eq.s32.totalorder %s33, 0
      %p54 = por %p52, %p53
      %p55 = scmp.ne.s32.totalorder %s41, %s42
      %p56 = scmp.eq.s32.totalorder %s34, 1
      %p57 = por %p55, %p56
      %p59 = scmp.ne.s32.totalorder %s42, %s58
      %p60 = scmp.eq.s32.totalorder %s34, 0
      %p61 = por %p59, %p60
      %s62 = ssub.s32 %s28, %s35
      %p63 = scmp.eq.s32.totalorder %s62, 0
      %s65 = sadd.s32 %s64, 1
      %s66 = scalar_select %p63, %s64, %s65
      %p69 = pneg %p63
      %p70 = scmp.eq.s32.totalorder %s28, 1
      %p71 = por %p69, %p70
      %p72 = scmp.ne.s32.totalorder %s64, %s67
      %p73 = scmp.eq.s32.totalorder %s28, 0
      %p74 = por %p72, %p73
      %p75 = scmp.ne.s32.totalorder %s64, %s67
      %p76 = scmp.eq.s32.totalorder %s33, 1
      %p77 = por %p75, %p76
      %p78 = scmp.ne.s32.totalorder %s67, %s68
      %p79 = scmp.eq.s32.totalorder %s33, 0
      %p80 = por %p78, %p79
      %p81 = scmp.ne.s32.totalorder %s67, %s68
      %p82 = scmp.eq.s32.totalorder %s34, 1
      %p83 = por %p81, %p82
      %p85 = scmp.ne.s32.totalorder %s68, %s84
      %p86 = scmp.eq.s32.totalorder %s34, 0
      %p87 = por %p85, %p86
      %s89 = sadd.s32 %s88, 1
      %p92 = scmp.eq.s32.totalorder %s28, 1
      %p93 = scmp.ne.s32.totalorder %s88, %s90
      %p94 = scmp.eq.s32.totalorder %s28, 0
      %p95 = por %p93, %p94
      %p96 = scmp.ne.s32.totalorder %s88, %s90
      %p97 = scmp.eq.s32.totalorder %s33, 1
      %p98 = por %p96, %p97
      %p99 = scmp.ne.s32.totalorder %s90, %s91
      %p100 = scmp.eq.s32.totalorder %s33, 0
      %p101 = por %p99, %p100
      %p102 = scmp.ne.s32.totalorder %s90, %s91
      %p103 = scmp.eq.s32.totalorder %s34, 1
      %p104 = por %p102, %p103
      %p106 = scmp.ne.s32.totalorder %s91, %s105
      %p107 = scmp.eq.s32.totalorder %s34, 0
      %p108 = por %p106, %p107
      %s110 = sadd.s32 %s109, 1
      %p113 = scmp.eq.s32.totalorder %s28, 1
      %p114 = scmp.ne.s32.totalorder %s109, %s111
      %p115 = scmp.eq.s32.totalorder %s28, 0
      %p116 = por %p114, %p115
      %p117 = scmp.ne.s32.totalorder %s109, %s111
      %p118 = scmp.eq.s32.totalorder %s33, 1
      %p119 = por %p117, %p118
      %p120 = scmp.ne.s32.totalorder %s111, %s112
      %p121 = scmp.eq.s32.totalorder %s33, 0
      %p122 = por %p120, %p121
      %p123 = scmp.ne.s32.totalorder %s111, %s112
      %p124 = scmp.eq.s32.totalorder %s34, 1
      %p125 = por %p123, %p124
      %p127 = scmp.ne.s32.totalorder %s112, %s126
      %p128 = scmp.eq.s32.totalorder %s34, 0
      %p129 = por %p127, %p128
      %s131 = sadd.s32 %s130, 1
      %p134 = scmp.eq.s32.totalorder %s28, 1
      %p135 = scmp.ne.s32.totalorder %s130, %s132
      %p136 = scmp.eq.s32.totalorder %s28, 0
      %p137 = por %p135, %p136
      %p138 = scmp.ne.s32.totalorder %s130, %s132
      %p139 = scmp.eq.s32.totalorder %s33, 1
      %p140 = por %p138, %p139
      %p141 = scmp.ne.s32.totalorder %s132, %s133
      %p142 = scmp.eq.s32.totalorder %s33, 0
      %p143 = por %p141, %p142
      %p144 = scmp.ne.s32.totalorder %s132, %s133
      %p145 = scmp.eq.s32.totalorder %s34, 1
      %p146 = por %p144, %p145
      %p148 = scmp.ne.s32.totalorder %s133, %s147
      %p149 = scmp.eq.s32.totalorder %s34, 0
      %p150 = por %p148, %p149
      %s152 = sadd.s32 %s151, 1
      %p155 = scmp.eq.s32.totalorder %s28, 1
      %p156 = scmp.ne.s32.totalorder %s151, %s153
      %p157 = scmp.eq.s32.totalorder %s28, 0
      %p158 = por %p156, %p157
      %p159 = scmp.ne.s32.totalorder %s151, %s153
      %p160 = scmp.eq.s32.totalorder %s33, 1
      %p161 = por %p159, %p160
      %p162 = scmp.ne.s32.totalorder %s153, %s154
      %p163 = scmp.eq.s32.totalorder %s33, 0
      %p164 = por %p162, %p163
      %p165 = scmp.ne.s32.totalorder %s153, %s154
      %p166 = scmp.eq.s32.totalorder %s34, 1
      %p167 = por %p165, %p166
      %p169 = scmp.ne.s32.totalorder %s154, %s168
      %p170 = scmp.eq.s32.totalorder %s34, 0
      %p171 = por %p169, %p170
      %s173 = sadd.s32 %s172, 1
      %p176 = scmp.eq.s32.totalorder %s28, 1
      %p177 = scmp.ne.s32.totalorder %s172, %s174
      %p178 = scmp.eq.s32.totalorder %s28, 0
      %p179 = por %p177, %p178
      %p180 = scmp.ne.s32.totalorder %s172, %s174
      %p181 = scmp.eq.s32.totalorder %s33, 1
      %p182 = por %p180, %p181
      %p183 = scmp.ne.s32.totalorder %s174, %s175
      %p184 = scmp.eq.s32.totalorder %s33, 0
      %p185 = por %p183, %p184
      %p186 = scmp.ne.s32.totalorder %s174, %s175
      %p187 = scmp.eq.s32.totalorder %s34, 1
      %p188 = por %p186, %p187
      %p190 = scmp.ne.s32.totalorder %s175, %s189
      %p191 = scmp.eq.s32.totalorder %s34, 0
      %p192 = por %p190, %p191
      %s194 = sadd.s32 %s193, 1
      %p197 = scmp.eq.s32.totalorder %s28, 1
      %p198 = scmp.ne.s32.totalorder %s193, %s195
      %p199 = scmp.eq.s32.totalorder %s28, 0
      %p200 = por %p198, %p199
      %p201 = scmp.ne.s32.totalorder %s193, %s195
      %p202 = scmp.eq.s32.totalorder %s33, 1
      %p203 = por %p201, %p202
      %p204 = scmp.ne.s32.totalorder %s195, %s196
      %p205 = scmp.eq.s32.totalorder %s33, 0
      %p206 = por %p204, %p205
      %p207 = scmp.ne.s32.totalorder %s195, %s196
      %p208 = scmp.eq.s32.totalorder %s34, 1
      %p209 = por %p207, %p208
      %p211 = scmp.ne.s32.totalorder %s196, %s210
      %p212 = scmp.eq.s32.totalorder %s34, 0
      %p213 = por %p211, %p212
      %s215 = sadd.s32 %s214, 1
      %p218 = scmp.eq.s32.totalorder %s28, 1
      %p219 = scmp.ne.s32.totalorder %s214, %s216
      %p220 = scmp.eq.s32.totalorder %s28, 0
      %p221 = por %p219, %p220
      %p222 = scmp.ne.s32.totalorder %s214, %s216
      %p223 = scmp.eq.s32.totalorder %s33, 1
      %p224 = por %p222, %p223
      %p225 = scmp.ne.s32.totalorder %s216, %s217
      %p226 = scmp.eq.s32.totalorder %s33, 0
      %p227 = por %p225, %p226
      %p228 = scmp.ne.s32.totalorder %s216, %s217
      %p229 = scmp.eq.s32.totalorder %s34, 1
      %p230 = por %p228, %p229
      %p232 = scmp.ne.s32.totalorder %s217, %s231
      %p233 = scmp.eq.s32.totalorder %s34, 0
      %p234 = por %p232, %p233
      %s236 = sadd.s32 %s235, 1
      %p239 = scmp.eq.s32.totalorder %s28, 1
      %p240 = scmp.ne.s32.totalorder %s235, %s237
      %p241 = scmp.eq.s32.totalorder %s28, 0
      %p242 = por %p240, %p241
      %p243 = scmp.ne.s32.totalorder %s235, %s237
      %p244 = scmp.eq.s32.totalorder %s33, 1
      %p245 = por %p243, %p244
      %p246 = scmp.ne.s32.totalorder %s237, %s238
      %p247 = scmp.eq.s32.totalorder %s33, 0
      %p248 = por %p246, %p247
      %p249 = scmp.ne.s32.totalorder %s237, %s238
      %p250 = scmp.eq.s32.totalorder %s34, 1
      %p251 = por %p249, %p250
      %p253 = scmp.ne.s32.totalorder %s238, %s252
      %p254 = scmp.eq.s32.totalorder %s34, 0
      %p255 = por %p253, %p254
      %s257 = sadd.s32 %s256, 1
      %p260 = scmp.eq.s32.totalorder %s28, 1
      %p261 = scmp.ne.s32.totalorder %s256, %s258
      %p262 = scmp.eq.s32.totalorder %s28, 0
      %p263 = por %p261, %p262
      %p264 = scmp.ne.s32.totalorder %s256, %s258
      %p265 = scmp.eq.s32.totalorder %s33, 1
      %p266 = por %p264, %p265
      %p267 = scmp.ne.s32.totalorder %s258, %s259
      %p268 = scmp.eq.s32.totalorder %s33, 0
      %p269 = por %p267, %p268
      %p270 = scmp.ne.s32.totalorder %s258, %s259
      %p271 = scmp.eq.s32.totalorder %s34, 1
      %p272 = por %p270, %p271
      %p274 = scmp.ne.s32.totalorder %s259, %s273
      %p275 = scmp.eq.s32.totalorder %s34, 0
      %p276 = por %p274, %p275
      %s278 = sadd.s32 %s277, 1
      %p281 = scmp.eq.s32.totalorder %s28, 1
      %p282 = scmp.ne.s32.totalorder %s277, %s279
      %p283 = scmp.eq.s32.totalorder %s28, 0
      %p284 = por %p282, %p283
      %p285 = scmp.ne.s32.totalorder %s277, %s279
      %p286 = scmp.eq.s32.totalorder %s33, 1
      %p287 = por %p285, %p286
      %p288 = scmp.ne.s32.totalorder %s279, %s280
      %p289 = scmp.eq.s32.totalorder %s33, 0
      %p290 = por %p288, %p289
      %p291 = scmp.ne.s32.totalorder %s279, %s280
      %p292 = scmp.eq.s32.totalorder %s34, 1
      %p293 = por %p291, %p292
      %p295 = scmp.ne.s32.totalorder %s280, %s294
      %p296 = scmp.eq.s32.totalorder %s34, 0
      %p297 = por %p295, %p296
      %s299 = sadd.s32 %s298, 1
      %p302 = scmp.eq.s32.totalorder %s28, 1
      %p303 = scmp.ne.s32.totalorder %s298, %s300
      %p304 = scmp.eq.s32.totalorder %s28, 0
      %p305 = por %p303, %p304
      %p306 = scmp.ne.s32.totalorder %s298, %s300
      %p307 = scmp.eq.s32.totalorder %s33, 1
      %p308 = por %p306, %p307
      %p309 = scmp.ne.s32.totalorder %s300, %s301
      %p310 = scmp.eq.s32.totalorder %s33, 0
      %p311 = por %p309, %p310
      %p312 = scmp.ne.s32.totalorder %s300, %s301
      %p313 = scmp.eq.s32.totalorder %s34, 1
      %p314 = por %p312, %p313
      %p316 = scmp.ne.s32.totalorder %s301, %s315
      %p317 = scmp.eq.s32.totalorder %s34, 0
      %p318 = por %p316, %p317
      %s320 = sadd.s32 %s319, 1
      %p323 = scmp.eq.s32.totalorder %s28, 1
      %p324 = scmp.ne.s32.totalorder %s319, %s321
      %p325 = scmp.eq.s32.totalorder %s28, 0
      %p326 = por %p324, %p325
      %p327 = scmp.ne.s32.totalorder %s319, %s321
      %p328 = scmp.eq.s32.totalorder %s33, 1
      %p329 = por %p327, %p328
      %p330 = scmp.ne.s32.totalorder %s321, %s322
      %p331 = scmp.eq.s32.totalorder %s33, 0
      %p332 = por %p330, %p331
      %p333 = scmp.ne.s32.totalorder %s321, %s322
      %p334 = scmp.eq.s32.totalorder %s34, 1
      %p335 = por %p333, %p334
      %p337 = scmp.ne.s32.totalorder %s322, %s336
      %p338 = scmp.eq.s32.totalorder %s34, 0
      %p339 = por %p337, %p338
      %s340 = ssub.s32 %s28, %s35
      %p341 = scmp.eq.s32.totalorder %s340, 0
      %s343 = sadd.s32 %s342, 1
      %s344 = scalar_select %p341, %s342, %s343
      %p347 = pneg %p341
      %p348 = scmp.eq.s32.totalorder %s28, 1
      %p349 = por %p347, %p348
      %p350 = scmp.ne.s32.totalorder %s342, %s345
      %p351 = scmp.eq.s32.totalorder %s28, 0
      %p352 = por %p350, %p351
      %p353 = scmp.ne.s32.totalorder %s342, %s345
      %p354 = scmp.eq.s32.totalorder %s33, 1
      %p355 = por %p353, %p354
      %p356 = scmp.ne.s32.totalorder %s345, %s346
      %p357 = scmp.eq.s32.totalorder %s33, 0
      %p358 = por %p356, %p357
      %p359 = scmp.ne.s32.totalorder %s345, %s346
      %p360 = scmp.eq.s32.totalorder %s34, 1
      %p361 = por %p359, %p360
      %p363 = scmp.ne.s32.totalorder %s346, %s362
      %p364 = scmp.eq.s32.totalorder %s34, 0
      %p365 = por %p363, %p364
      %s366 = ssub.s32 %s28, %s35
      %p367 = scmp.eq.s32.totalorder %s366, 0
      %s369 = sadd.s32 %s368, 1
      %s370 = scalar_select %p367, %s368, %s369
      %p373 = pneg %p367
      %p374 = scmp.eq.s32.totalorder %s28, 1
      %p375 = por %p373, %p374
      %p376 = scmp.ne.s32.totalorder %s368, %s371
      %p377 = scmp.eq.s32.totalorder %s28, 0
      %p378 = por %p376, %p377
      %p379 = scmp.ne.s32.totalorder %s368, %s371
      %p380 = scmp.eq.s32.totalorder %s33, 1
      %p381 = por %p379, %p380
      %p382 = scmp.ne.s32.totalorder %s371, %s372
      %p383 = scmp.eq.s32.totalorder %s33, 0
      %p384 = por %p382, %p383
      %p385 = scmp.ne.s32.totalorder %s371, %s372
      %p386 = scmp.eq.s32.totalorder %s34, 1
      %p387 = por %p385, %p386
      %p389 = scmp.ne.s32.totalorder %s372, %s388
      %p390 = scmp.eq.s32.totalorder %s34, 0
      %p391 = por %p389, %p390
      %p392 = scmp.le.s32.totalorder 1, %s28
      %p393 = scmp.lt.s32.totalorder %s28, 3
      %p394 = pnand %p392, %p393
      %p395 = pneg %p394
      // Predicated region
      $region9: #{tpu_custom_call.1} parent=5 // pred_check
        _
      $region10: #{tpu_custom_call.1} parent=5 // pred_check_branch
        %397 = sbr.rel (%p394) target = $region12
      $region11: #{tpu_custom_call.1} parent=5 // pred_region
        %s398 = ssub.s32 %s28, 1
        // Predicated region
        $region13: #{tpu_custom_call.1} parent=11 // pred_check
          %p399 = pneg %p101
        $region14: #{tpu_custom_call.1} parent=11 // pred_check_branch
          %401 = sbr.rel (%p399) target = $region16
        $region15: #{tpu_custom_call.1} parent=11 // pred_region
          %s403 = ssub.s32 4096, 4096
          %404 = vsyncadd [#allocation3], %s403
          %s405 = sshll.u32 [#allocation2], 4
          %s406 = int_to_ptr.vmem [resolvable:$true] %s405
          %411 = dma.hbm_to_vmem [thread:$0]  %s2, 4096, %s406, [#allocation3], 128, 128, 8
        $region16: #{tpu_custom_call.1} parent=11 // pred_fallthru
          _
        // Predicated region
        $region17: #{tpu_custom_call.1} parent=11 // pred_check
          %p412 = pneg %p122
        $region18: #{tpu_custom_call.1} parent=11 // pred_check_branch
          %414 = sbr.rel (%p412) target = $region20
        $region19: #{tpu_custom_call.1} parent=11 // pred_region
          _
        $region20: #{tpu_custom_call.1} parent=11 // pred_fallthru
          _
        // Predicated region
        $region21: #{tpu_custom_call.1} parent=11 // pred_check
          %p415 = pneg %p143
        $region22: #{tpu_custom_call.1} parent=11 // pred_check_branch
          %417 = sbr.rel (%p415) target = $region24
        $region23: #{tpu_custom_call.1} parent=11 // pred_region
          %s419 = ssub.s32 4096, 4096
          %420 = vsyncadd [#allocation6], %s419
          %s421 = sshll.u32 [#allocation5], 4
          %s422 = int_to_ptr.vmem [resolvable:$true] %s421
          %427 = dma.hbm_to_vmem [thread:$0]  %s4, 4096, %s422, [#allocation6], 128, 128, 8
        $region24: #{tpu_custom_call.1} parent=11 // pred_fallthru
          _
        // Predicated region
        $region25: #{tpu_custom_call.1} parent=11 // pred_check
          %p428 = pneg %p164
        $region26: #{tpu_custom_call.1} parent=11 // pred_check_branch
          %430 = sbr.rel (%p428) target = $region28
        $region27: #{tpu_custom_call.1} parent=11 // pred_region
          _
        $region28: #{tpu_custom_call.1} parent=11 // pred_fallthru
          _
        // Predicated region
        $region29: #{tpu_custom_call.1} parent=11 // pred_check
          %p431 = pneg %p185
        $region30: #{tpu_custom_call.1} parent=11 // pred_check_branch
          %433 = sbr.rel (%p431) target = $region32
        $region31: #{tpu_custom_call.1} parent=11 // pred_region
          _
        $region32: #{tpu_custom_call.1} parent=11 // pred_fallthru
          _
        // Predicated region
        $region33: #{tpu_custom_call.1} parent=11 // pred_check
          %p434 = pneg %p206
        $region34: #{tpu_custom_call.1} parent=11 // pred_check_branch
          %436 = sbr.rel (%p434) target = $region36
        $region35: #{tpu_custom_call.1} parent=11 // pred_region
          _
        $region36: #{tpu_custom_call.1} parent=11 // pred_fallthru
          _
        // Predicated region
        $region37: #{tpu_custom_call.1} parent=11 // pred_check
          %p437 = pneg %p227
        $region38: #{tpu_custom_call.1} parent=11 // pred_check_branch
          %439 = sbr.rel (%p437) target = $region40
        $region39: #{tpu_custom_call.1} parent=11 // pred_region
          _
        $region40: #{tpu_custom_call.1} parent=11 // pred_fallthru
          _
        // Predicated region
        $region41: #{tpu_custom_call.1} parent=11 // pred_check
          %p440 = pneg %p248
        $region42: #{tpu_custom_call.1} parent=11 // pred_check_branch
          %442 = sbr.rel (%p440) target = $region44
        $region43: #{tpu_custom_call.1} parent=11 // pred_region
          _
        $region44: #{tpu_custom_call.1} parent=11 // pred_fallthru
          _
        // Predicated region
        $region45: #{tpu_custom_call.1} parent=11 // pred_check
          %p443 = pneg %p269
        $region46: #{tpu_custom_call.1} parent=11 // pred_check_branch
          %445 = sbr.rel (%p443) target = $region48
        $region47: #{tpu_custom_call.1} parent=11 // pred_region
          %s447 = ssub.s32 4096, 4096
          %448 = vsyncadd [#allocation6], %s447
          %s449 = sshll.u32 [#allocation7], 4
          %s450 = int_to_ptr.vmem [resolvable:$true] %s449
          %455 = dma.hbm_to_vmem [thread:$0]  %s10, 4096, %s450, [#allocation6], 128, 128, 8
        $region48: #{tpu_custom_call.1} parent=11 // pred_fallthru
          _
        // Predicated region
        $region49: #{tpu_custom_call.1} parent=11 // pred_check
          %p456 = pneg %p290
        $region50: #{tpu_custom_call.1} parent=11 // pred_check_branch
          %458 = sbr.rel (%p456) target = $region52
        $region51: #{tpu_custom_call.1} parent=11 // pred_region
          _
        $region52: #{tpu_custom_call.1} parent=11 // pred_fallthru
          _
        // Predicated region
        $region53: #{tpu_custom_call.1} parent=11 // pred_check
          %p459 = pneg %p311
        $region54: #{tpu_custom_call.1} parent=11 // pred_check_branch
          %461 = sbr.rel (%p459) target = $region56
        $region55: #{tpu_custom_call.1} parent=11 // pred_region
          %s463 = ssub.s32 4096, 4096
          %464 = vsyncadd [#allocation9], %s463
          %s465 = sshll.u32 [#allocation8], 4
          %s466 = int_to_ptr.vmem [resolvable:$true] %s465
          %471 = dma.hbm_to_vmem [thread:$0]  %s12, 4096, %s466, [#allocation9], 128, 128, 8
        $region56: #{tpu_custom_call.1} parent=11 // pred_fallthru
          _
        // Predicated region
        $region57: #{tpu_custom_call.1} parent=11 // pred_check
          %p472 = pneg %p332
        $region58: #{tpu_custom_call.1} parent=11 // pred_check_branch
          %474 = sbr.rel (%p472) target = $region60
        $region59: #{tpu_custom_call.1} parent=11 // pred_region
          _
        $region60: #{tpu_custom_call.1} parent=11 // pred_fallthru
          _
      $region12: #{tpu_custom_call.1} parent=5 // pred_fallthru
        _
      %p475 = scmp.lt.s32.totalorder %s28, 2
      // Predicated region
      $region61: #{tpu_custom_call.1} parent=5 // pred_check
        %p476 = pneg %p475
      $region62: #{tpu_custom_call.1} parent=5 // pred_check_branch
        %478 = sbr.rel (%p476) target = $region64
      $region63: #{tpu_custom_call.1} parent=5 // pred_region
        // Predicated region
        $region65: #{tpu_custom_call.1} parent=63 // pred_check
          %p479 = pneg %p48
        $region66: #{tpu_custom_call.1} parent=63 // pred_check_branch
          %481 = sbr.rel (%p479) target = $region68
        $region67: #{tpu_custom_call.1} parent=63 // pred_region
          %s482 = smul.u32 4, %s28
          %s483 = ssub.s32 5, %s482
          %p484 = scmp.lt.s32.totalorder %s483, 4
          %s485 = scalar_select %p484, %s483, 4
          %s486 = smul.u32 128, %s485
          %s487 = smul.u32 %s486, 2
          %p488 = scmp.lt.s32.totalorder %s482, 4
          %s489 = scalar_select %p488, %s482, 4
          %s490 = smul.addr %s489, 2
          %s491 = smul.addr %s490, 8
          %s492 = scalar_lea.vmem %s0, %s491
          %s493 = smul.u32 4, %s28
          %s494 = ssub.s32 5, %s493
          %p495 = scmp.lt.s32.totalorder %s494, 4
          %s496 = scalar_select %p495, %s494, 4
          %s497 = smul.u32 128, %s496
          %s498 = smul.u32 %s497, 2
        $region68: #{tpu_custom_call.1} parent=63 // pred_fallthru
          _
        // Predicated region
        $region69: #{tpu_custom_call.1} parent=63 // pred_check
          %p499 = pneg %p74
        $region70: #{tpu_custom_call.1} parent=63 // pred_check_branch
          %501 = sbr.rel (%p499) target = $region72
        $region71: #{tpu_custom_call.1} parent=63 // pred_region
          %s502 = smul.u32 4, %s28
          %s503 = ssub.s32 5, %s502
          %p504 = scmp.lt.s32.totalorder %s503, 4
          %s505 = scalar_select %p504, %s503, 4
          %s506 = smul.u32 128, %s505
          %p507 = scmp.lt.s32.totalorder %s502, 4
          %s508 = scalar_select %p507, %s502, 4
          %s509 = smul.addr %s508, 8
          %s510 = scalar_lea.vmem %s1, %s509
          %s511 = smul.u32 4, %s28
          %s512 = ssub.s32 5, %s511
          %p513 = scmp.lt.s32.totalorder %s512, 4
          %s514 = scalar_select %p513, %s512, 4
          %s515 = smul.u32 128, %s514
        $region72: #{tpu_custom_call.1} parent=63 // pred_fallthru
          _
      $region64: #{tpu_custom_call.1} parent=5 // pred_fallthru
        _
      %p516 = scmp.le.s32.totalorder 1, %s28
      %p517 = scmp.lt.s32.totalorder %s28, 3
      %p518 = pnand %p516, %p517
      %p519 = pneg %p518
      // Predicated region
      $region73: #{tpu_custom_call.1} parent=5 // pred_check
        _
      $region74: #{tpu_custom_call.1} parent=5 // pred_check_branch
        %521 = sbr.rel (%p518) target = $region76
      $region75: #{tpu_custom_call.1} parent=5 // pred_region
        %s522 = ssub.s32 %s28, 1
        // Predicated region
        $region77: #{tpu_custom_call.1} parent=75 // pred_check
          %p523 = pneg %p101
        $region78: #{tpu_custom_call.1} parent=75 // pred_check_branch
          %525 = sbr.rel (%p523) target = $region80
        $region79: #{tpu_custom_call.1} parent=75 // pred_region
          %526 = dma.done [#allocation3], 4096
        $region80: #{tpu_custom_call.1} parent=75 // pred_fallthru
          _
        // Predicated region
        $region81: #{tpu_custom_call.1} parent=75 // pred_check
          %p527 = pneg %p143
        $region82: #{tpu_custom_call.1} parent=75 // pred_check_branch
          %529 = sbr.rel (%p527) target = $region84
        $region83: #{tpu_custom_call.1} parent=75 // pred_region
          %530 = dma.done [#allocation6], 4096
        $region84: #{tpu_custom_call.1} parent=75 // pred_fallthru
          _
        // Predicated region
        $region85: #{tpu_custom_call.1} parent=75 // pred_check
          %p531 = pneg %p269
        $region86: #{tpu_custom_call.1} parent=75 // pred_check_branch
          %533 = sbr.rel (%p531) target = $region88
        $region87: #{tpu_custom_call.1} parent=75 // pred_region
          %534 = dma.done [#allocation6], 4096
        $region88: #{tpu_custom_call.1} parent=75 // pred_fallthru
          _
        // Predicated region
        $region89: #{tpu_custom_call.1} parent=75 // pred_check
          %p535 = pneg %p311
        $region90: #{tpu_custom_call.1} parent=75 // pred_check_branch
          %537 = sbr.rel (%p535) target = $region92
        $region91: #{tpu_custom_call.1} parent=75 // pred_region
          %538 = dma.done [#allocation9], 4096
        $region92: #{tpu_custom_call.1} parent=75 // pred_fallthru
          _
        %s539 = smul.u32 4, %s33
        %s540 = ssub.s32 5, %s539
        %p541 = scmp.lt.s32.totalorder %s540, 4
        %s542 = scalar_select %p541, %s540, 4
        %s543 = smul.u32 128, %s542
        %s544 = smul.u32 %s543, 2
        %p545 = scmp.lt.s32.totalorder %s539, 4
        %s546 = scalar_select %p545, %s539, 4
        %s547 = smul.addr %s546, 2
        %s548 = smul.addr %s547, 8
        %s549 = scalar_lea.vmem %s0, %s548
        %p550 = pneg %p54
        %p551 = pneg %p51
        %s552 = smul.u32 4, %s33
        %s553 = ssub.s32 5, %s552
        %p554 = scmp.lt.s32.totalorder %s553, 4
        %s555 = scalar_select %p554, %s553, 4
        %s556 = smul.u32 128, %s555
        %p557 = scmp.lt.s32.totalorder %s552, 4
        %s558 = scalar_select %p557, %s552, 4
        %s559 = smul.addr %s558, 8
        %s560 = scalar_lea.vmem %s1, %s559
        %p561 = pneg %p80
        %p562 = pneg %p77
        %p563 = pneg %p101
        %p564 = pneg %p98
        %p565 = pneg %p122
        %p566 = pneg %p119
        %p567 = pneg %p143
        %p568 = pneg %p140
        %p569 = pneg %p164
        %p570 = pneg %p161
        %p571 = pneg %p185
        %p572 = pneg %p182
        %p573 = pneg %p206
        %p574 = pneg %p203
        %p575 = pneg %p227
        %p576 = pneg %p224
        %p577 = pneg %p248
        %p578 = pneg %p245
        %p579 = pneg %p269
        %p580 = pneg %p266
        %p581 = pneg %p290
        %p582 = pneg %p287
        %p583 = pneg %p311
        %p584 = pneg %p308
        %p585 = pneg %p332
        %p586 = pneg %p329
        %p587 = pneg %p358
        %p588 = pneg %p355
        %s589 = sand.u32 %s345, 1
        %s590 = sand.u32 %s345, 1
        %s591 = smul.addr %s590, 32
        %s592 = scalar_lea.vmem [#allocation10], %s591
        %p593 = pneg %p384
        %p594 = pneg %p381
        %s595 = sand.u32 %s371, 1
        %s596 = scalar_lea.sflag [#allocation4], %s595
        %s597 = sand.u32 %s371, 1
        %s598 = smul.addr %s597, 32
        %s599 = scalar_lea.vmem [#allocation11], %s598
        %s600 = smul.u32 4, %s33
        %s601 = ssub.s32 5, %s600
        %p602 = scmp.lt.s32.totalorder %s601, 4
        %s603 = scalar_select %p602, %s601, 4
        %s604 = smul.u32 128, %s603
        %s605 = smul.u32 %s604, 2
        %p606 = scmp.lt.s32.totalorder %s600, 4
        %s607 = scalar_select %p606, %s600, 4
        %s608 = smul.addr %s607, 2
        %s609 = smul.addr %s608, 8
        %s610 = scalar_lea.vmem %s0, %s609
        %s611 = smul.u32 4, %s33
        %s612 = ssub.s32 5, %s611
        %p613 = scmp.lt.s32.totalorder %s612, 4
        %s614 = scalar_select %p613, %s612, 4
        %s615 = smul.u32 128, %s614
        %s616 = smul.u32 %s615, 2
        %s617 = smul.u32 4, %s33
        %s618 = ssub.s32 5, %s617
        %p619 = scmp.lt.s32.totalorder %s618, 4
        %s620 = scalar_select %p619, %s618, 4
        %s621 = smul.u32 128, %s620
        %p622 = scmp.lt.s32.totalorder %s617, 4
        %s623 = scalar_select %p622, %s617, 4
        %s624 = smul.addr %s623, 8
        %s625 = scalar_lea.vmem %s1, %s624
        %s626 = smul.u32 4, %s33
        %s627 = ssub.s32 5, %s626
        %p628 = scmp.lt.s32.totalorder %s627, 4
        %s629 = scalar_select %p628, %s627, 4
        %s630 = smul.u32 128, %s629
        %s631 = smul.u32 4, %s33
        %s632 = ssub.s32 5, %s631
        %p633 = scmp.lt.s32.totalorder %s632, 4
        %s634 = scalar_select %p633, %s632, 4
        %s635 = smul.u32 128, %s634
        %s636 = smul.u32 4, %s33
        %s637 = ssub.s32 5, %s636
        %p638 = scmp.lt.s32.totalorder %s637, 4
        %s639 = scalar_select %p638, %s637, 4
        %s640 = smul.u32 64, %s639
        %s641 = smul.u32 %s640, 2
        %v644 = vld [vmem:[%s610] sm:$0xff]
        %v645 = vld [vmem:[%s610 + $0x8] sm:$0xff]
        %v646 = vld [vmem:[%s610 + $0x10] sm:$0xff]
        %v647 = vld [vmem:[%s610 + $0x18] sm:$0xff]
        %v648 = vld [vmem:[%s610 + $0x20] sm:$0xff]
        %v649 = vld [vmem:[%s610 + $0x28] sm:$0xff]
        %v650 = vld [vmem:[%s610 + $0x30] sm:$0xff]
        %v651 = vld [vmem:[%s610 + $0x38] sm:$0xff]
        %v652 = vpack.c.bf16 %v646, %v644
        %v653 = vpack.c.bf16 %v647, %v645
        %v654 = vpack.c.bf16 %v650, %v648
        %v655 = vpack.c.bf16 %v651, %v649
        %v656 = vld [vmem:[#allocation2] sm:$0xff]
        %v657 = vld [vmem:[#allocation2 + $0x8] sm:$0xff]
        %v658 = vld [vmem:[#allocation2 + $0x10] sm:$0xff]
        %v659 = vld [vmem:[#allocation2 + $0x18] sm:$0xff]
        %v660 = vld [vmem:[#allocation2 + $0x20] sm:$0xff]
        %v661 = vld [vmem:[#allocation2 + $0x28] sm:$0xff]
        %v662 = vld [vmem:[#allocation2 + $0x30] sm:$0xff]
        %v663 = vld [vmem:[#allocation2 + $0x38] sm:$0xff]
        %v664 = vld [vmem:[#allocation2 + $0x40] sm:$0xff]
        %v665 = vld [vmem:[#allocation2 + $0x48] sm:$0xff]
        %v666 = vld [vmem:[#allocation2 + $0x50] sm:$0xff]
        %v667 = vld [vmem:[#allocation2 + $0x58] sm:$0xff]
        %v668 = vld [vmem:[#allocation2 + $0x60] sm:$0xff]
        %v669 = vld [vmem:[#allocation2 + $0x68] sm:$0xff]
        %v670 = vld [vmem:[#allocation2 + $0x70] sm:$0xff]
        %v671 = vld [vmem:[#allocation2 + $0x78] sm:$0xff]
        %v672 = vld [vmem:[#allocation2 + $0x80] sm:$0xff]
        %v673 = vld [vmem:[#allocation2 + $0x88] sm:$0xff]
        %v674 = vld [vmem:[#allocation2 + $0x90] sm:$0xff]
        %v675 = vld [vmem:[#allocation2 + $0x98] sm:$0xff]
        %v676 = vld [vmem:[#allocation2 + $0xa0] sm:$0xff]
        %v677 = vld [vmem:[#allocation2 + $0xa8] sm:$0xff]
        %v678 = vld [vmem:[#allocation2 + $0xb0] sm:$0xff]
        %v679 = vld [vmem:[#allocation2 + $0xb8] sm:$0xff]
        %v680 = vld [vmem:[#allocation2 + $0xc0] sm:$0xff]
        %v681 = vld [vmem:[#allocation2 + $0xc8] sm:$0xff]
        %v682 = vld [vmem:[#allocation2 + $0xd0] sm:$0xff]
        %v683 = vld [vmem:[#allocation2 + $0xd8] sm:$0xff]
        %v684 = vld [vmem:[#allocation2 + $0xe0] sm:$0xff]
        %v685 = vld [vmem:[#allocation2 + $0xe8] sm:$0xff]
        %v686 = vld [vmem:[#allocation2 + $0xf0] sm:$0xff]
        %v687 = vld [vmem:[#allocation2 + $0xf8] sm:$0xff]
        %v688 = vld [vmem:[%s3] sm:$0x3]
        %v690 = vlaneseq
        %v691 = vshrl.u32 %v690, 7
        %v692 = vsub.s32 0, %v691
        %v693 = vrot.slane %v688, %v692
        %v694 = vlaneseq
        %v695 = vshrl.u32 %v694, 7
        %v696 = vsub.s32 1, %v695
        %v697 = vrot.slane %v688, %v696
        %v732 = vunpack.c.l.b16 %v656
        %v733 = vunpack.c.h.b16 %v656
        %v734 = vunpack.c.l.b16 %v657
        %v735 = vunpack.c.h.b16 %v657
        %v736 = vunpack.c.l.b16 %v658
        %v737 = vunpack.c.h.b16 %v658
        %v738 = vunpack.c.l.b16 %v659
        %v739 = vunpack.c.h.b16 %v659
        %v740 = vunpack.c.l.b16 %v660
        %v741 = vunpack.c.h.b16 %v660
        %v742 = vunpack.c.l.b16 %v661
        %v743 = vunpack.c.h.b16 %v661
        %v744 = vunpack.c.l.b16 %v662
        %v745 = vunpack.c.h.b16 %v662
        %v746 = vunpack.c.l.b16 %v663
        %v747 = vunpack.c.h.b16 %v663
        %v748 = vunpack.c.l.b16 %v664
        %v749 = vunpack.c.h.b16 %v664
        %v750 = vunpack.c.l.b16 %v665
        %v751 = vunpack.c.h.b16 %v665
        %v752 = vunpack.c.l.b16 %v666
        %v753 = vunpack.c.h.b16 %v666
        %v754 = vunpack.c.l.b16 %v667
        %v755 = vunpack.c.h.b16 %v667
        %v756 = vunpack.c.l.b16 %v668
        %v757 = vunpack.c.h.b16 %v668
        %v758 = vunpack.c.l.b16 %v669
        %v759 = vunpack.c.h.b16 %v669
        %v760 = vunpack.c.l.b16 %v670
        %v761 = vunpack.c.h.b16 %v670
        %v762 = vunpack.c.l.b16 %v671
        %v763 = vunpack.c.h.b16 %v671
        %v764 = vunpack.c.l.b16 %v672
        %v765 = vunpack.c.h.b16 %v672
        %v766 = vunpack.c.l.b16 %v673
        %v767 = vunpack.c.h.b16 %v673
        %v768 = vunpack.c.l.b16 %v674
        %v769 = vunpack.c.h.b16 %v674
        %v770 = vunpack.c.l.b16 %v675
        %v771 = vunpack.c.h.b16 %v675
        %v772 = vunpack.c.l.b16 %v676
        %v773 = vunpack.c.h.b16 %v676
        %v774 = vunpack.c.l.b16 %v677
        %v775 = vunpack.c.h.b16 %v677
        %v776 = vunpack.c.l.b16 %v678
        %v777 = vunpack.c.h.b16 %v678
        %v778 = vunpack.c.l.b16 %v679
        %v779 = vunpack.c.h.b16 %v679
        %v780 = vunpack.c.l.b16 %v680
        %v781 = vunpack.c.h.b16 %v680
        %v782 = vunpack.c.l.b16 %v681
        %v783 = vunpack.c.h.b16 %v681
        %v784 = vunpack.c.l.b16 %v682
        %v785 = vunpack.c.h.b16 %v682
        %v786 = vunpack.c.l.b16 %v683
        %v787 = vunpack.c.h.b16 %v683
        %v788 = vunpack.c.l.b16 %v684
        %v789 = vunpack.c.h.b16 %v684
        %v790 = vunpack.c.l.b16 %v685
        %v791 = vunpack.c.h.b16 %v685
        %v792 = vunpack.c.l.b16 %v686
        %v793 = vunpack.c.h.b16 %v686
        %v794 = vunpack.c.l.b16 %v687
        %v795 = vunpack.c.h.b16 %v687
        %v796 = vpack.c.b16 %v734, %v732
        %v797 = vpack.c.b16 %v735, %v733
        %v798 = vpack.c.b16 %v738, %v736
        %v799 = vpack.c.b16 %v739, %v737
        %v800 = vpack.c.b16 %v742, %v740
        %v801 = vpack.c.b16 %v743, %v741
        %v802 = vpack.c.b16 %v746, %v744
        %v803 = vpack.c.b16 %v747, %v745
        %v804 = vpack.c.b16 %v750, %v748
        %v805 = vpack.c.b16 %v751, %v749
        %v806 = vpack.c.b16 %v754, %v752
        %v807 = vpack.c.b16 %v755, %v753
        %v808 = vpack.c.b16 %v758, %v756
        %v809 = vpack.c.b16 %v759, %v757
        %v810 = vpack.c.b16 %v762, %v760
        %v811 = vpack.c.b16 %v763, %v761
        %v812 = vpack.c.b16 %v766, %v764
        %v813 = vpack.c.b16 %v767, %v765
        %v814 = vpack.c.b16 %v770, %v768
        %v815 = vpack.c.b16 %v771, %v769
        %v816 = vpack.c.b16 %v774, %v772
        %v817 = vpack.c.b16 %v775, %v773
        %v818 = vpack.c.b16 %v778, %v776
        %v819 = vpack.c.b16 %v779, %v777
        %v820 = vpack.c.b16 %v782, %v780
        %v821 = vpack.c.b16 %v783, %v781
        %v822 = vpack.c.b16 %v786, %v784
        %v823 = vpack.c.b16 %v787, %v785
        %v824 = vpack.c.b16 %v790, %v788
        %v825 = vpack.c.b16 %v791, %v789
        %v826 = vpack.c.b16 %v794, %v792
        %v827 = vpack.c.b16 %v795, %v793
        %860 = vmatprep.subr.bf16.mxu0 %v811
        %861 = vmatpush1.bf16.msra.mxu0 %v810
        %862 = vmatprep.subr.bf16.mxu0 %v809
        %863 = vmatpush1.bf16.msra.mxu0 %v808
        %864 = vmatprep.subr.bf16.mxu0 %v807
        %865 = vmatpush1.bf16.msra.mxu0 %v806
        %866 = vmatprep.subr.bf16.mxu0 %v805
        %867 = vmatpush1.bf16.msra.mxu0 %v804
        %868 = vmatprep.subr.bf16.mxu0 %v803
        %869 = vmatpush1.bf16.msra.mxu0 %v802
        %870 = vmatprep.subr.bf16.mxu0 %v801
        %871 = vmatpush1.bf16.msra.mxu0 %v800
        %872 = vmatprep.subr.bf16.mxu0 %v799
        %873 = vmatpush1.bf16.msra.mxu0 %v798
        %874 = vmatprep.subr.bf16.mxu0 %v797
        %875 = vmatpush1.bf16.msra.mxu0 %v796
        %876 = vmatprep.subr.bf16.mxu0 %v827
        %877 = vmatpush2.bf16.msra.mxu0 %v826
        %878 = vmatprep.subr.bf16.mxu0 %v825
        %879 = vmatpush2.bf16.msra.mxu0 %v824
        %880 = vmatprep.subr.bf16.mxu0 %v823
        %881 = vmatpush2.bf16.msra.mxu0 %v822
        %882 = vmatprep.subr.bf16.mxu0 %v821
        %883 = vmatpush2.bf16.msra.mxu0 %v820
        %884 = vmatprep.subr.bf16.mxu0 %v819
        %885 = vmatpush2.bf16.msra.mxu0 %v818
        %886 = vmatprep.subr.bf16.mxu0 %v817
        %887 = vmatpush2.bf16.msra.mxu0 %v816
        %888 = vmatprep.subr.bf16.mxu0 %v815
        %889 = vmatpush2.bf16.msra.mxu0 %v814
        %890 = vmatprep.subr.bf16.mxu0 %v813
        %891 = vmatpush2.bf16.msra.mxu0 %v812
        %892 = vmatprep.mubr.bf16.mxu0 %v653
        %893 = vmatmul.mubr.bf16.gmra.mxu0 %v652
        %v894 = vpop.f32.mrf.mxu0
        %v895 = vadd.f32 %v693, %v894
        %v896 = vpop.f32.mrf.mxu0
        %v897 = vadd.f32 %v697, %v896
        %v898 = vpop.f32.mrf.mxu0
        %v899 = vadd.f32 %v693, %v898
        %v900 = vpop.f32.mrf.mxu0
        %v901 = vadd.f32 %v697, %v900
        %902 = vmatprep.mubr.bf16.mxu0 %v655
        %903 = vmatmul.mubr.bf16.gmra.mxu0 %v654
        %v904 = vpop.f32.mrf.mxu0
        %v905 = vadd.f32 %v693, %v904
        %v906 = vpop.f32.mrf.mxu0
        %v907 = vadd.f32 %v697, %v906
        %v908 = vpop.f32.mrf.mxu0
        %v909 = vadd.f32 %v693, %v908
        %v910 = vpop.f32.mrf.mxu0
        %v911 = vadd.f32 %v697, %v910
        %912 = vdwg.mxu0
        %v913 = vpack.c.bf16 %v899, %v895
        %v914 = vpack.c.bf16 %v901, %v897
        %v915 = vpack.c.bf16 %v909, %v905
        %v916 = vpack.c.bf16 %v911, %v907
        %v917 = vtanh.bf16.pop %v913
        %v918 = vtanh.bf16.pop %v914
        %v919 = vtanh.bf16.pop %v915
        %v920 = vtanh.bf16.pop %v916
        %v921 = vld [vmem:[#allocation5] sm:$0xff]
        %v922 = vld [vmem:[#allocation5 + $0x8] sm:$0xff]
        %v923 = vld [vmem:[#allocation5 + $0x10] sm:$0xff]
        %v924 = vld [vmem:[#allocation5 + $0x18] sm:$0xff]
        %v925 = vld [vmem:[#allocation5 + $0x20] sm:$0xff]
        %v926 = vld [vmem:[#allocation5 + $0x28] sm:$0xff]
        %v927 = vld [vmem:[#allocation5 + $0x30] sm:$0xff]
        %v928 = vld [vmem:[#allocation5 + $0x38] sm:$0xff]
        %v929 = vld [vmem:[#allocation5 + $0x40] sm:$0xff]
        %v930 = vld [vmem:[#allocation5 + $0x48] sm:$0xff]
        %v931 = vld [vmem:[#allocation5 + $0x50] sm:$0xff]
        %v932 = vld [vmem:[#allocation5 + $0x58] sm:$0xff]
        %v933 = vld [vmem:[#allocation5 + $0x60] sm:$0xff]
        %v934 = vld [vmem:[#allocation5 + $0x68] sm:$0xff]
        %v935 = vld [vmem:[#allocation5 + $0x70] sm:$0xff]
        %v936 = vld [vmem:[#allocation5 + $0x78] sm:$0xff]
        %v937 = vld [vmem:[#allocation5 + $0x80] sm:$0xff]
        %v938 = vld [vmem:[#allocation5 + $0x88] sm:$0xff]
        %v939 = vld [vmem:[#allocation5 + $0x90] sm:$0xff]
        %v940 = vld [vmem:[#allocation5 + $0x98] sm:$0xff]
        %v941 = vld [vmem:[#allocation5 + $0xa0] sm:$0xff]
        %v942 = vld [vmem:[#allocation5 + $0xa8] sm:$0xff]
        %v943 = vld [vmem:[#allocation5 + $0xb0] sm:$0xff]
        %v944 = vld [vmem:[#allocation5 + $0xb8] sm:$0xff]
        %v945 = vld [vmem:[#allocation5 + $0xc0] sm:$0xff]
        %v946 = vld [vmem:[#allocation5 + $0xc8] sm:$0xff]
        %v947 = vld [vmem:[#allocation5 + $0xd0] sm:$0xff]
        %v948 = vld [vmem:[#allocation5 + $0xd8] sm:$0xff]
        %v949 = vld [vmem:[#allocation5 + $0xe0] sm:$0xff]
        %v950 = vld [vmem:[#allocation5 + $0xe8] sm:$0xff]
        %v951 = vld [vmem:[#allocation5 + $0xf0] sm:$0xff]
        %v952 = vld [vmem:[#allocation5 + $0xf8] sm:$0xff]
        %v953 = vld [vmem:[%s5] sm:$0x3]
        %v955 = vlaneseq
        %v956 = vshrl.u32 %v955, 7
        %v957 = vsub.s32 0, %v956
        %v958 = vrot.slane %v953, %v957
        %v959 = vlaneseq
        %v960 = vshrl.u32 %v959, 7
        %v961 = vsub.s32 1, %v960
        %v962 = vrot.slane %v953, %v961
        %v997 = vunpack.c.l.b16 %v921
        %v998 = vunpack.c.h.b16 %v921
        %v999 = vunpack.c.l.b16 %v922
        %v1000 = vunpack.c.h.b16 %v922
        %v1001 = vunpack.c.l.b16 %v923
        %v1002 = vunpack.c.h.b16 %v923
        %v1003 = vunpack.c.l.b16 %v924
        %v1004 = vunpack.c.h.b16 %v924
        %v1005 = vunpack.c.l.b16 %v925
        %v1006 = vunpack.c.h.b16 %v925
        %v1007 = vunpack.c.l.b16 %v926
        %v1008 = vunpack.c.h.b16 %v926
        %v1009 = vunpack.c.l.b16 %v927
        %v1010 = vunpack.c.h.b16 %v927
        %v1011 = vunpack.c.l.b16 %v928
        %v1012 = vunpack.c.h.b16 %v928
        %v1013 = vunpack.c.l.b16 %v929
        %v1014 = vunpack.c.h.b16 %v929
        %v1015 = vunpack.c.l.b16 %v930
        %v1016 = vunpack.c.h.b16 %v930
        %v1017 = vunpack.c.l.b16 %v931
        %v1018 = vunpack.c.h.b16 %v931
        %v1019 = vunpack.c.l.b16 %v932
        %v1020 = vunpack.c.h.b16 %v932
        %v1021 = vunpack.c.l.b16 %v933
        %v1022 = vunpack.c.h.b16 %v933
        %v1023 = vunpack.c.l.b16 %v934
        %v1024 = vunpack.c.h.b16 %v934
        %v1025 = vunpack.c.l.b16 %v935
        %v1026 = vunpack.c.h.b16 %v935
        %v1027 = vunpack.c.l.b16 %v936
        %v1028 = vunpack.c.h.b16 %v936
        %v1029 = vunpack.c.l.b16 %v937
        %v1030 = vunpack.c.h.b16 %v937
        %v1031 = vunpack.c.l.b16 %v938
        %v1032 = vunpack.c.h.b16 %v938
        %v1033 = vunpack.c.l.b16 %v939
        %v1034 = vunpack.c.h.b16 %v939
        %v1035 = vunpack.c.l.b16 %v940
        %v1036 = vunpack.c.h.b16 %v940
        %v1037 = vunpack.c.l.b16 %v941
        %v1038 = vunpack.c.h.b16 %v941
        %v1039 = vunpack.c.l.b16 %v942
        %v1040 = vunpack.c.h.b16 %v942
        %v1041 = vunpack.c.l.b16 %v943
        %v1042 = vunpack.c.h.b16 %v943
        %v1043 = vunpack.c.l.b16 %v944
        %v1044 = vunpack.c.h.b16 %v944
        %v1045 = vunpack.c.l.b16 %v945
        %v1046 = vunpack.c.h.b16 %v945
        %v1047 = vunpack.c.l.b16 %v946
        %v1048 = vunpack.c.h.b16 %v946
        %v1049 = vunpack.c.l.b16 %v947
        %v1050 = vunpack.c.h.b16 %v947
        %v1051 = vunpack.c.l.b16 %v948
        %v1052 = vunpack.c.h.b16 %v948
        %v1053 = vunpack.c.l.b16 %v949
        %v1054 = vunpack.c.h.b16 %v949
        %v1055 = vunpack.c.l.b16 %v950
        %v1056 = vunpack.c.h.b16 %v950
        %v1057 = vunpack.c.l.b16 %v951
        %v1058 = vunpack.c.h.b16 %v951
        %v1059 = vunpack.c.l.b16 %v952
        %v1060 = vunpack.c.h.b16 %v952
        %v1061 = vpack.c.b16 %v999, %v997
        %v1062 = vpack.c.b16 %v1000, %v998
        %v1063 = vpack.c.b16 %v1003, %v1001
        %v1064 = vpack.c.b16 %v1004, %v1002
        %v1065 = vpack.c.b16 %v1007, %v1005
        %v1066 = vpack.c.b16 %v1008, %v1006
        %v1067 = vpack.c.b16 %v1011, %v1009
        %v1068 = vpack.c.b16 %v1012, %v1010
        %v1069 = vpack.c.b16 %v1015, %v1013
        %v1070 = vpack.c.b16 %v1016, %v1014
        %v1071 = vpack.c.b16 %v1019, %v1017
        %v1072 = vpack.c.b16 %v1020, %v1018
        %v1073 = vpack.c.b16 %v1023, %v1021
        %v1074 = vpack.c.b16 %v1024, %v1022
        %v1075 = vpack.c.b16 %v1027, %v1025
        %v1076 = vpack.c.b16 %v1028, %v1026
        %v1077 = vpack.c.b16 %v1031, %v1029
        %v1078 = vpack.c.b16 %v1032, %v1030
        %v1079 = vpack.c.b16 %v1035, %v1033
        %v1080 = vpack.c.b16 %v1036, %v1034
        %v1081 = vpack.c.b16 %v1039, %v1037
        %v1082 = vpack.c.b16 %v1040, %v1038
        %v1083 = vpack.c.b16 %v1043, %v1041
        %v1084 = vpack.c.b16 %v1044, %v1042
        %v1085 = vpack.c.b16 %v1047, %v1045
        %v1086 = vpack.c.b16 %v1048, %v1046
        %v1087 = vpack.c.b16 %v1051, %v1049
        %v1088 = vpack.c.b16 %v1052, %v1050
        %v1089 = vpack.c.b16 %v1055, %v1053
        %v1090 = vpack.c.b16 %v1056, %v1054
        %v1091 = vpack.c.b16 %v1059, %v1057
        %v1092 = vpack.c.b16 %v1060, %v1058
        %1125 = vmatprep.subr.bf16.mxu0 %v1076
        %1126 = vmatpush1.bf16.msra.mxu0 %v1075
        %1127 = vmatprep.subr.bf16.mxu0 %v1074
        %1128 = vmatpush1.bf16.msra.mxu0 %v1073
        %1129 = vmatprep.subr.bf16.mxu0 %v1072
        %1130 = vmatpush1.bf16.msra.mxu0 %v1071
        %1131 = vmatprep.subr.bf16.mxu0 %v1070
        %1132 = vmatpush1.bf16.msra.mxu0 %v1069
        %1133 = vmatprep.subr.bf16.mxu0 %v1068
        %1134 = vmatpush1.bf16.msra.mxu0 %v1067
        %1135 = vmatprep.subr.bf16.mxu0 %v1066
        %1136 = vmatpush1.bf16.msra.mxu0 %v1065
        %1137 = vmatprep.subr.bf16.mxu0 %v1064
        %1138 = vmatpush1.bf16.msra.mxu0 %v1063
        %1139 = vmatprep.subr.bf16.mxu0 %v1062
        %1140 = vmatpush1.bf16.msra.mxu0 %v1061
        %1141 = vmatprep.subr.bf16.mxu0 %v1092
        %1142 = vmatpush2.bf16.msra.mxu0 %v1091
        %1143 = vmatprep.subr.bf16.mxu0 %v1090
        %1144 = vmatpush2.bf16.msra.mxu0 %v1089
        %1145 = vmatprep.subr.bf16.mxu0 %v1088
        %1146 = vmatpush2.bf16.msra.mxu0 %v1087
        %1147 = vmatprep.subr.bf16.mxu0 %v1086
        %1148 = vmatpush2.bf16.msra.mxu0 %v1085
        %1149 = vmatprep.subr.bf16.mxu0 %v1084
        %1150 = vmatpush2.bf16.msra.mxu0 %v1083
        %1151 = vmatprep.subr.bf16.mxu0 %v1082
        %1152 = vmatpush2.bf16.msra.mxu0 %v1081
        %1153 = vmatprep.subr.bf16.mxu0 %v1080
        %1154 = vmatpush2.bf16.msra.mxu0 %v1079
        %1155 = vmatprep.subr.bf16.mxu0 %v1078
        %1156 = vmatpush2.bf16.msra.mxu0 %v1077
        %1157 = vmatprep.mubr.bf16.mxu0 %v918
        %1158 = vmatmul.mubr.bf16.gmra.mxu0 %v917
        %v1159 = vpop.f32.mrf.mxu0
        %v1160 = vadd.f32 %v958, %v1159
        %v1161 = vpop.f32.mrf.mxu0
        %v1162 = vadd.f32 %v962, %v1161
        %v1163 = vpop.f32.mrf.mxu0
        %v1164 = vadd.f32 %v958, %v1163
        %v1165 = vpop.f32.mrf.mxu0
        %v1166 = vadd.f32 %v962, %v1165
        %1167 = vmatprep.mubr.bf16.mxu0 %v920
        %1168 = vmatmul.mubr.bf16.gmra.mxu0 %v919
        %v1169 = vpop.f32.mrf.mxu0
        %v1170 = vadd.f32 %v958, %v1169
        %v1171 = vpop.f32.mrf.mxu0
        %v1172 = vadd.f32 %v962, %v1171
        %v1173 = vpop.f32.mrf.mxu0
        %v1174 = vadd.f32 %v958, %v1173
        %v1175 = vpop.f32.mrf.mxu0
        %v1176 = vadd.f32 %v962, %v1175
        %1177 = vdwg.mxu0
        %v1178 = vpack.c.bf16 %v1164, %v1160
        %v1179 = vpack.c.bf16 %v1166, %v1162
        %v1180 = vpack.c.bf16 %v1174, %v1170
        %v1181 = vpack.c.bf16 %v1176, %v1172
        %v1182 = vtanh.bf16.pop %v1178
        %v1183 = vtanh.bf16.pop %v1179
        %v1184 = vtanh.bf16.pop %v1180
        %v1185 = vtanh.bf16.pop %v1181
        %v1186 = vld [vmem:[%s6] sm:$0xf]
        %v1187 = vld [vmem:[%s6 + $0x4] sm:$0xf]
        %v1188 = vld [vmem:[%s6 + $0x8] sm:$0xf]
        %v1189 = vld [vmem:[%s6 + $0xc] sm:$0xf]
        %v1190 = vld [vmem:[%s6 + $0x10] sm:$0xf]
        %v1191 = vld [vmem:[%s6 + $0x14] sm:$0xf]
        %v1192 = vld [vmem:[%s6 + $0x18] sm:$0xf]
        %v1193 = vld [vmem:[%s6 + $0x1c] sm:$0xf]
        %v1194 = vld [vmem:[%s6 + $0x20] sm:$0xf]
        %v1195 = vld [vmem:[%s6 + $0x24] sm:$0xf]
        %v1196 = vld [vmem:[%s6 + $0x28] sm:$0xf]
        %v1197 = vld [vmem:[%s6 + $0x2c] sm:$0xf]
        %v1198 = vld [vmem:[%s6 + $0x30] sm:$0xf]
        %v1199 = vld [vmem:[%s6 + $0x34] sm:$0xf]
        %v1200 = vld [vmem:[%s6 + $0x38] sm:$0xf]
        %v1201 = vld [vmem:[%s6 + $0x3c] sm:$0xf]
        %v1202 = vld [vmem:[%s6 + $0x40] sm:$0xf]
        %v1203 = vld [vmem:[%s6 + $0x44] sm:$0xf]
        %v1204 = vld [vmem:[%s6 + $0x48] sm:$0xf]
        %v1205 = vld [vmem:[%s6 + $0x4c] sm:$0xf]
        %v1206 = vld [vmem:[%s6 + $0x50] sm:$0xf]
        %v1207 = vld [vmem:[%s6 + $0x54] sm:$0xf]
        %v1208 = vld [vmem:[%s6 + $0x58] sm:$0xf]
        %v1209 = vld [vmem:[%s6 + $0x5c] sm:$0xf]
        %v1210 = vld [vmem:[%s6 + $0x60] sm:$0xf]
        %v1211 = vld [vmem:[%s6 + $0x64] sm:$0xf]
        %v1212 = vld [vmem:[%s6 + $0x68] sm:$0xf]
        %v1213 = vld [vmem:[%s6 + $0x6c] sm:$0xf]
        %v1214 = vld [vmem:[%s6 + $0x70] sm:$0xf]
        %v1215 = vld [vmem:[%s6 + $0x74] sm:$0xf]
        %v1216 = vld [vmem:[%s6 + $0x78] sm:$0xf]
        %v1217 = vld [vmem:[%s6 + $0x7c] sm:$0xf]
        %v1218 = vld [vmem:[%s7] sm:$0x1]
        %v1220 = vlaneseq
        %v1221 = vshrl.u32 %v1220, 7
        %v1222 = vsub.s32 0, %v1221
        %v1223 = vrot.slane %v1218, %v1222
        %v1257 = vunpack.c.l.b16 %v1186
        %v1258 = vunpack.c.l.b16 %v1187
        %v1259 = vunpack.c.l.b16 %v1188
        %v1260 = vunpack.c.l.b16 %v1189
        %v1261 = vunpack.c.l.b16 %v1190
        %v1262 = vunpack.c.l.b16 %v1191
        %v1263 = vunpack.c.l.b16 %v1192
        %v1264 = vunpack.c.l.b16 %v1193
        %v1265 = vunpack.c.l.b16 %v1194
        %v1266 = vunpack.c.l.b16 %v1195
        %v1267 = vunpack.c.l.b16 %v1196
        %v1268 = vunpack.c.l.b16 %v1197
        %v1269 = vunpack.c.l.b16 %v1198
        %v1270 = vunpack.c.l.b16 %v1199
        %v1271 = vunpack.c.l.b16 %v1200
        %v1272 = vunpack.c.l.b16 %v1201
        %v1273 = vunpack.c.l.b16 %v1202
        %v1274 = vunpack.c.l.b16 %v1203
        %v1275 = vunpack.c.l.b16 %v1204
        %v1276 = vunpack.c.l.b16 %v1205
        %v1277 = vunpack.c.l.b16 %v1206
        %v1278 = vunpack.c.l.b16 %v1207
        %v1279 = vunpack.c.l.b16 %v1208
        %v1280 = vunpack.c.l.b16 %v1209
        %v1281 = vunpack.c.l.b16 %v1210
        %v1282 = vunpack.c.l.b16 %v1211
        %v1283 = vunpack.c.l.b16 %v1212
        %v1284 = vunpack.c.l.b16 %v1213
        %v1285 = vunpack.c.l.b16 %v1214
        %v1286 = vunpack.c.l.b16 %v1215
        %v1287 = vunpack.c.l.b16 %v1216
        %v1288 = vunpack.c.l.b16 %v1217
        %v1289 = vpack.c.b16 %v1258, %v1257
        %v1290 = vpack.c.b16 %v1260, %v1259
        %v1291 = vpack.c.b16 %v1262, %v1261
        %v1292 = vpack.c.b16 %v1264, %v1263
        %v1293 = vpack.c.b16 %v1266, %v1265
        %v1294 = vpack.c.b16 %v1268, %v1267
        %v1295 = vpack.c.b16 %v1270, %v1269
        %v1296 = vpack.c.b16 %v1272, %v1271
        %v1297 = vpack.c.b16 %v1274, %v1273
        %v1298 = vpack.c.b16 %v1276, %v1275
        %v1299 = vpack.c.b16 %v1278, %v1277
        %v1300 = vpack.c.b16 %v1280, %v1279
        %v1301 = vpack.c.b16 %v1282, %v1281
        %v1302 = vpack.c.b16 %v1284, %v1283
        %v1303 = vpack.c.b16 %v1286, %v1285
        %v1304 = vpack.c.b16 %v1288, %v1287
        %1321 = vmatprep.subr.bf16.mxu0 0
        %1322 = vmatpush1.bf16.msra.mxu0 %v1296
        %1323 = vmatprep.subr.bf16.mxu0 0
        %1324 = vmatpush1.bf16.msra.mxu0 %v1295
        %1325 = vmatprep.subr.bf16.mxu0 0
        %1326 = vmatpush1.bf16.msra.mxu0 %v1294
        %1327 = vmatprep.subr.bf16.mxu0 0
        %1328 = vmatpush1.bf16.msra.mxu0 %v1293
        %1329 = vmatprep.subr.bf16.mxu0 0
        %1330 = vmatpush1.bf16.msra.mxu0 %v1292
        %1331 = vmatprep.subr.bf16.mxu0 0
        %1332 = vmatpush1.bf16.msra.mxu0 %v1291
        %1333 = vmatprep.subr.bf16.mxu0 0
        %1334 = vmatpush1.bf16.msra.mxu0 %v1290
        %1335 = vmatprep.subr.bf16.mxu0 0
        %1336 = vmatpush1.bf16.msra.mxu0 %v1289
        %1337 = vmatprep.subr.bf16.mxu0 0
        %1338 = vmatpush2.bf16.msra.mxu0 %v1304
        %1339 = vmatprep.subr.bf16.mxu0 0
        %1340 = vmatpush2.bf16.msra.mxu0 %v1303
        %1341 = vmatprep.subr.bf16.mxu0 0
        %1342 = vmatpush2.bf16.msra.mxu0 %v1302
        %1343 = vmatprep.subr.bf16.mxu0 0
        %1344 = vmatpush2.bf16.msra.mxu0 %v1301
        %1345 = vmatprep.subr.bf16.mxu0 0
        %1346 = vmatpush2.bf16.msra.mxu0 %v1300
        %1347 = vmatprep.subr.bf16.mxu0 0
        %1348 = vmatpush2.bf16.msra.mxu0 %v1299
        %1349 = vmatprep.subr.bf16.mxu0 0
        %1350 = vmatpush2.bf16.msra.mxu0 %v1298
        %1351 = vmatprep.subr.bf16.mxu0 0
        %1352 = vmatpush2.bf16.msra.mxu0 %v1297
        %1353 = vmatprep.mubr.bf16.mxu0 %v1183
        %1354 = vmatmul.mubr.bf16.gmra.mxu0 %v1182
        %v1355 = vpop.f32.mrf.mxu0
        %v1356 = vadd.f32 %v1223, %v1355
        %v1357 = vpop.f32.mrf.mxu0
        %v1358 = vpop.f32.mrf.mxu0
        %v1359 = vadd.f32 %v1223, %v1358
        %v1360 = vpop.f32.mrf.mxu0
        %1361 = vmatprep.mubr.bf16.mxu0 %v1185
        %1362 = vmatmul.mubr.bf16.gmra.mxu0 %v1184
        %v1363 = vpop.f32.mrf.mxu0
        %v1364 = vadd.f32 %v1223, %v1363
        %v1365 = vpop.f32.mrf.mxu0
        %v1366 = vpop.f32.mrf.mxu0
        %v1367 = vadd.f32 %v1223, %v1366
        %v1368 = vpop.f32.mrf.mxu0
        %1369 = vdwg.mxu0
        %v1370 = vld [vmem:[%s625] sm:$0xff]
        %v1371 = vld [vmem:[%s625 + $0x8] sm:$0xff]
        %v1372 = vld [vmem:[%s625 + $0x10] sm:$0xff]
        %v1373 = vld [vmem:[%s625 + $0x18] sm:$0xff]
        %v1374 = vmul.f32 %v1356, 0.5
        %v1375 = vmul.f32 %v1359, 0.5
        %v1376 = vmul.f32 %v1364, 0.5
        %v1377 = vmul.f32 %v1367, 0.5
        %v1378 = vmul.f32 %v1374, 1.442695
        %v1379 = vpow.pop %v1378
        %v1380 = vmul.f32 %v1375, 1.442695
        %v1381 = vpow.pop %v1380
        %v1382 = vmul.f32 %v1376, 1.442695
        %v1383 = vpow.pop %v1382
        %v1384 = vmul.f32 %v1377, 1.442695
        %v1385 = vpow.pop %v1384
        %1390 = vrot.lane.b32.xlu0 %v1379, 124
        %v1391 = vpop.permute.xlu0 %1390
        %1392 = vrot.lane.b32.xlu0 %v1381, 124
        %v1393 = vpop.permute.xlu0 %1392
        %1394 = vrot.lane.b32.xlu0 %v1383, 124
        %v1395 = vpop.permute.xlu0 %1394
        %1396 = vrot.lane.b32.xlu0 %v1385, 124
        %v1397 = vpop.permute.xlu0 %1396
        %v1402 = vmul.f32 %v1370, %v1391
        %v1403 = vmul.f32 %v1371, %v1393
        %v1404 = vmul.f32 %v1372, %v1395
        %v1405 = vmul.f32 %v1373, %v1397
        %v1406 = vadd.f32 %v1402, %v1356
        %v1407 = vadd.f32 %v1403, %v1359
        %v1408 = vadd.f32 %v1404, %v1364
        %v1409 = vadd.f32 %v1405, %v1367
        %v1410 = vld [vmem:[%s8] sm:$0xf]
        %v1411 = vunpack.c.l.bf16 %v1410
        %v1412 = vld [vmem:[%s9] sm:$0x3]
        %1414 = vset.pattern.permute.xlu0 0
        %1415 = vperm.xlu0 %1414, %v1406
        %v1416 = vpop.permute.xlu0 %1415
        %1419 = vset.pattern.permute.xlu0 0
        %1420 = vperm.xlu0 %1419, %v1407
        %v1421 = vpop.permute.xlu0 %1420
        %1424 = vset.pattern.permute.xlu0 0
        %1425 = vperm.xlu0 %1424, %v1408
        %v1426 = vpop.permute.xlu0 %1425
        %1429 = vset.pattern.permute.xlu0 0
        %1430 = vperm.xlu0 %1429, %v1409
        %v1431 = vpop.permute.xlu0 %1430
        %v1434 = vlaneseq
        %v1435 = vshrl.u32 %v1434, 7
        %v1436 = vsub.s32 0, %v1435
        %v1437 = vrot.slane %v1411, %v1436
        %v1438 = vlaneseq
        %v1439 = vshrl.u32 %v1438, 7
        %v1440 = vsub.s32 4, %v1439
        %v1441 = vrot.slane %v1411, %v1440
        %v1444 = vlaneseq
        %v1445 = vshrl.u32 %v1444, 7
        %v1446 = vsub.s32 0, %v1445
        %v1447 = vrot.slane %v1437, %v1446
        %v1448 = vlaneseq
        %v1449 = vshrl.u32 %v1448, 7
        %v1450 = vsub.s32 0, %v1449
        %v1451 = vrot.slane %v1441, %v1450
        %v1452 = vmul.f32 %v1416, %v1447
        %v1453 = vmul.f32 %v1416, %v1451
        %v1454 = vmul.f32 %v1421, %v1447
        %v1455 = vmul.f32 %v1421, %v1451
        %v1456 = vmul.f32 %v1426, %v1447
        %v1457 = vmul.f32 %v1426, %v1451
        %v1458 = vmul.f32 %v1431, %v1447
        %v1459 = vmul.f32 %v1431, %v1451
        %v1461 = vlaneseq
        %v1462 = vshrl.u32 %v1461, 7
        %v1463 = vsub.s32 0, %v1462
        %v1464 = vrot.slane %v1412, %v1463
        %v1465 = vlaneseq
        %v1466 = vshrl.u32 %v1465, 7
        %v1467 = vsub.s32 1, %v1466
        %v1468 = vrot.slane %v1412, %v1467
        %v1471 = vadd.f32 %v1464, %v1452
        %v1472 = vadd.f32 %v1468, %v1453
        %v1473 = vadd.f32 %v1464, %v1454
        %v1474 = vadd.f32 %v1468, %v1455
        %v1475 = vadd.f32 %v1464, %v1456
        %v1476 = vadd.f32 %v1468, %v1457
        %v1477 = vadd.f32 %v1464, %v1458
        %v1478 = vadd.f32 %v1468, %v1459
        %1479 = vset.pattern.permute.xlu0 1
        %1480 = vperm.xlu0 %1479, %v1406
        %v1481 = vpop.permute.xlu0 %1480
        %1483 = vset.pattern.permute.xlu0 1
        %1484 = vperm.xlu0 %1483, %v1407
        %v1485 = vpop.permute.xlu0 %1484
        %1487 = vset.pattern.permute.xlu0 1
        %1488 = vperm.xlu0 %1487, %v1408
        %v1489 = vpop.permute.xlu0 %1488
        %1491 = vset.pattern.permute.xlu0 1
        %1492 = vperm.xlu0 %1491, %v1409
        %v1493 = vpop.permute.xlu0 %1492
        %v1495 = vlaneseq
        %v1496 = vshrl.u32 %v1495, 7
        %v1497 = vsub.s32 1, %v1496
        %v1498 = vrot.slane %v1411, %v1497
        %v1499 = vlaneseq
        %v1500 = vshrl.u32 %v1499, 7
        %v1501 = vsub.s32 5, %v1500
        %v1502 = vrot.slane %v1411, %v1501
        %v1505 = vlaneseq
        %v1506 = vshrl.u32 %v1505, 7
        %v1507 = vsub.s32 1, %v1506
        %v1508 = vrot.slane %v1498, %v1507
        %v1509 = vlaneseq
        %v1510 = vshrl.u32 %v1509, 7
        %v1511 = vsub.s32 1, %v1510
        %v1512 = vrot.slane %v1502, %v1511
        %v1513 = vmul.f32 %v1481, %v1508
        %v1514 = vmul.f32 %v1481, %v1512
        %v1515 = vmul.f32 %v1485, %v1508
        %v1516 = vmul.f32 %v1485, %v1512
        %v1517 = vmul.f32 %v1489, %v1508
        %v1518 = vmul.f32 %v1489, %v1512
        %v1519 = vmul.f32 %v1493, %v1508
        %v1520 = vmul.f32 %v1493, %v1512
        %v1521 = vadd.f32 %v1471, %v1513
        %v1522 = vadd.f32 %v1472, %v1514
        %v1523 = vadd.f32 %v1473, %v1515
        %v1524 = vadd.f32 %v1474, %v1516
        %v1525 = vadd.f32 %v1475, %v1517
        %v1526 = vadd.f32 %v1476, %v1518
        %v1527 = vadd.f32 %v1477, %v1519
        %v1528 = vadd.f32 %v1478, %v1520
        %1529 = vset.pattern.permute.xlu0 2
        %1530 = vperm.xlu0 %1529, %v1406
        %v1531 = vpop.permute.xlu0 %1530
        %1533 = vset.pattern.permute.xlu0 2
        %1534 = vperm.xlu0 %1533, %v1407
        %v1535 = vpop.permute.xlu0 %1534
        %1537 = vset.pattern.permute.xlu0 2
        %1538 = vperm.xlu0 %1537, %v1408
        %v1539 = vpop.permute.xlu0 %1538
        %1541 = vset.pattern.permute.xlu0 2
        %1542 = vperm.xlu0 %1541, %v1409
        %v1543 = vpop.permute.xlu0 %1542
        %v1545 = vlaneseq
        %v1546 = vshrl.u32 %v1545, 7
        %v1547 = vsub.s32 2, %v1546
        %v1548 = vrot.slane %v1411, %v1547
        %v1549 = vlaneseq
        %v1550 = vshrl.u32 %v1549, 7
        %v1551 = vsub.s32 6, %v1550
        %v1552 = vrot.slane %v1411, %v1551
        %v1555 = vlaneseq
        %v1556 = vshrl.u32 %v1555, 7
        %v1557 = vsub.s32 2, %v1556
        %v1558 = vrot.slane %v1548, %v1557
        %v1559 = vlaneseq
        %v1560 = vshrl.u32 %v1559, 7
        %v1561 = vsub.s32 2, %v1560
        %v1562 = vrot.slane %v1552, %v1561
        %v1563 = vmul.f32 %v1531, %v1558
        %v1564 = vmul.f32 %v1531, %v1562
        %v1565 = vmul.f32 %v1535, %v1558
        %v1566 = vmul.f32 %v1535, %v1562
        %v1567 = vmul.f32 %v1539, %v1558
        %v1568 = vmul.f32 %v1539, %v1562
        %v1569 = vmul.f32 %v1543, %v1558
        %v1570 = vmul.f32 %v1543, %v1562
        %v1571 = vadd.f32 %v1521, %v1563
        %v1572 = vadd.f32 %v1522, %v1564
        %v1573 = vadd.f32 %v1523, %v1565
        %v1574 = vadd.f32 %v1524, %v1566
        %v1575 = vadd.f32 %v1525, %v1567
        %v1576 = vadd.f32 %v1526, %v1568
        %v1577 = vadd.f32 %v1527, %v1569
        %v1578 = vadd.f32 %v1528, %v1570
        %1579 = vset.pattern.permute.xlu0 3
        %1580 = vperm.xlu0 %1579, %v1406
        %v1581 = vpop.permute.xlu0 %1580
        %1583 = vset.pattern.permute.xlu0 3
        %1584 = vperm.xlu0 %1583, %v1407
        %v1585 = vpop.permute.xlu0 %1584
        %1587 = vset.pattern.permute.xlu0 3
        %1588 = vperm.xlu0 %1587, %v1408
        %v1589 = vpop.permute.xlu0 %1588
        %1591 = vset.pattern.permute.xlu0 3
        %1592 = vperm.xlu0 %1591, %v1409
        %v1593 = vpop.permute.xlu0 %1592
        %v1595 = vlaneseq
        %v1596 = vshrl.u32 %v1595, 7
        %v1597 = vsub.s32 3, %v1596
        %v1598 = vrot.slane %v1411, %v1597
        %v1599 = vlaneseq
        %v1600 = vshrl.u32 %v1599, 7
        %v1601 = vsub.s32 7, %v1600
        %v1602 = vrot.slane %v1411, %v1601
        %v1605 = vlaneseq
        %v1606 = vshrl.u32 %v1605, 7
        %v1607 = vsub.s32 3, %v1606
        %v1608 = vrot.slane %v1598, %v1607
        %v1609 = vlaneseq
        %v1610 = vshrl.u32 %v1609, 7
        %v1611 = vsub.s32 3, %v1610
        %v1612 = vrot.slane %v1602, %v1611
        %v1613 = vmul.f32 %v1581, %v1608
        %v1614 = vmul.f32 %v1581, %v1612
        %v1615 = vmul.f32 %v1585, %v1608
        %v1616 = vmul.f32 %v1585, %v1612
        %v1617 = vmul.f32 %v1589, %v1608
        %v1618 = vmul.f32 %v1589, %v1612
        %v1619 = vmul.f32 %v1593, %v1608
        %v1620 = vmul.f32 %v1593, %v1612
        %v1621 = vadd.f32 %v1571, %v1613
        %v1622 = vadd.f32 %v1572, %v1614
        %v1623 = vadd.f32 %v1573, %v1615
        %v1624 = vadd.f32 %v1574, %v1616
        %v1625 = vadd.f32 %v1575, %v1617
        %v1626 = vadd.f32 %v1576, %v1618
        %v1627 = vadd.f32 %v1577, %v1619
        %v1628 = vadd.f32 %v1578, %v1620
        %v1629 = vpack.c.bf16 %v1623, %v1621
        %v1630 = vpack.c.bf16 %v1624, %v1622
        %v1631 = vpack.c.bf16 %v1627, %v1625
        %v1632 = vpack.c.bf16 %v1628, %v1626
        %v1633 = vtanh.bf16.pop %v1629
        %v1634 = vtanh.bf16.pop %v1630
        %v1635 = vtanh.bf16.pop %v1631
        %v1636 = vtanh.bf16.pop %v1632
        %v1637 = vld [vmem:[#allocation7] sm:$0xff]
        %v1638 = vld [vmem:[#allocation7 + $0x8] sm:$0xff]
        %v1639 = vld [vmem:[#allocation7 + $0x10] sm:$0xff]
        %v1640 = vld [vmem:[#allocation7 + $0x18] sm:$0xff]
        %v1641 = vld [vmem:[#allocation7 + $0x20] sm:$0xff]
        %v1642 = vld [vmem:[#allocation7 + $0x28] sm:$0xff]
        %v1643 = vld [vmem:[#allocation7 + $0x30] sm:$0xff]
        %v1644 = vld [vmem:[#allocation7 + $0x38] sm:$0xff]
        %v1645 = vld [vmem:[#allocation7 + $0x40] sm:$0xff]
        %v1646 = vld [vmem:[#allocation7 + $0x48] sm:$0xff]
        %v1647 = vld [vmem:[#allocation7 + $0x50] sm:$0xff]
        %v1648 = vld [vmem:[#allocation7 + $0x58] sm:$0xff]
        %v1649 = vld [vmem:[#allocation7 + $0x60] sm:$0xff]
        %v1650 = vld [vmem:[#allocation7 + $0x68] sm:$0xff]
        %v1651 = vld [vmem:[#allocation7 + $0x70] sm:$0xff]
        %v1652 = vld [vmem:[#allocation7 + $0x78] sm:$0xff]
        %v1653 = vld [vmem:[#allocation7 + $0x80] sm:$0xff]
        %v1654 = vld [vmem:[#allocation7 + $0x88] sm:$0xff]
        %v1655 = vld [vmem:[#allocation7 + $0x90] sm:$0xff]
        %v1656 = vld [vmem:[#allocation7 + $0x98] sm:$0xff]
        %v1657 = vld [vmem:[#allocation7 + $0xa0] sm:$0xff]
        %v1658 = vld [vmem:[#allocation7 + $0xa8] sm:$0xff]
        %v1659 = vld [vmem:[#allocation7 + $0xb0] sm:$0xff]
        %v1660 = vld [vmem:[#allocation7 + $0xb8] sm:$0xff]
        %v1661 = vld [vmem:[#allocation7 + $0xc0] sm:$0xff]
        %v1662 = vld [vmem:[#allocation7 + $0xc8] sm:$0xff]
        %v1663 = vld [vmem:[#allocation7 + $0xd0] sm:$0xff]
        %v1664 = vld [vmem:[#allocation7 + $0xd8] sm:$0xff]
        %v1665 = vld [vmem:[#allocation7 + $0xe0] sm:$0xff]
        %v1666 = vld [vmem:[#allocation7 + $0xe8] sm:$0xff]
        %v1667 = vld [vmem:[#allocation7 + $0xf0] sm:$0xff]
        %v1668 = vld [vmem:[#allocation7 + $0xf8] sm:$0xff]
        %v1669 = vld [vmem:[%s11] sm:$0x3]
        %v1671 = vlaneseq
        %v1672 = vshrl.u32 %v1671, 7
        %v1673 = vsub.s32 0, %v1672
        %v1674 = vrot.slane %v1669, %v1673
        %v1675 = vlaneseq
        %v1676 = vshrl.u32 %v1675, 7
        %v1677 = vsub.s32 1, %v1676
        %v1678 = vrot.slane %v1669, %v1677
        %v1713 = vunpack.c.l.b16 %v1637
        %v1714 = vunpack.c.h.b16 %v1637
        %v1715 = vunpack.c.l.b16 %v1638
        %v1716 = vunpack.c.h.b16 %v1638
        %v1717 = vunpack.c.l.b16 %v1639
        %v1718 = vunpack.c.h.b16 %v1639
        %v1719 = vunpack.c.l.b16 %v1640
        %v1720 = vunpack.c.h.b16 %v1640
        %v1721 = vunpack.c.l.b16 %v1641
        %v1722 = vunpack.c.h.b16 %v1641
        %v1723 = vunpack.c.l.b16 %v1642
        %v1724 = vunpack.c.h.b16 %v1642
        %v1725 = vunpack.c.l.b16 %v1643
        %v1726 = vunpack.c.h.b16 %v1643
        %v1727 = vunpack.c.l.b16 %v1644
        %v1728 = vunpack.c.h.b16 %v1644
        %v1729 = vunpack.c.l.b16 %v1645
        %v1730 = vunpack.c.h.b16 %v1645
        %v1731 = vunpack.c.l.b16 %v1646
        %v1732 = vunpack.c.h.b16 %v1646
        %v1733 = vunpack.c.l.b16 %v1647
        %v1734 = vunpack.c.h.b16 %v1647
        %v1735 = vunpack.c.l.b16 %v1648
        %v1736 = vunpack.c.h.b16 %v1648
        %v1737 = vunpack.c.l.b16 %v1649
        %v1738 = vunpack.c.h.b16 %v1649
        %v1739 = vunpack.c.l.b16 %v1650
        %v1740 = vunpack.c.h.b16 %v1650
        %v1741 = vunpack.c.l.b16 %v1651
        %v1742 = vunpack.c.h.b16 %v1651
        %v1743 = vunpack.c.l.b16 %v1652
        %v1744 = vunpack.c.h.b16 %v1652
        %v1745 = vunpack.c.l.b16 %v1653
        %v1746 = vunpack.c.h.b16 %v1653
        %v1747 = vunpack.c.l.b16 %v1654
        %v1748 = vunpack.c.h.b16 %v1654
        %v1749 = vunpack.c.l.b16 %v1655
        %v1750 = vunpack.c.h.b16 %v1655
        %v1751 = vunpack.c.l.b16 %v1656
        %v1752 = vunpack.c.h.b16 %v1656
        %v1753 = vunpack.c.l.b16 %v1657
        %v1754 = vunpack.c.h.b16 %v1657
        %v1755 = vunpack.c.l.b16 %v1658
        %v1756 = vunpack.c.h.b16 %v1658
        %v1757 = vunpack.c.l.b16 %v1659
        %v1758 = vunpack.c.h.b16 %v1659
        %v1759 = vunpack.c.l.b16 %v1660
        %v1760 = vunpack.c.h.b16 %v1660
        %v1761 = vunpack.c.l.b16 %v1661
        %v1762 = vunpack.c.h.b16 %v1661
        %v1763 = vunpack.c.l.b16 %v1662
        %v1764 = vunpack.c.h.b16 %v1662
        %v1765 = vunpack.c.l.b16 %v1663
        %v1766 = vunpack.c.h.b16 %v1663
        %v1767 = vunpack.c.l.b16 %v1664
        %v1768 = vunpack.c.h.b16 %v1664
        %v1769 = vunpack.c.l.b16 %v1665
        %v1770 = vunpack.c.h.b16 %v1665
        %v1771 = vunpack.c.l.b16 %v1666
        %v1772 = vunpack.c.h.b16 %v1666
        %v1773 = vunpack.c.l.b16 %v1667
        %v1774 = vunpack.c.h.b16 %v1667
        %v1775 = vunpack.c.l.b16 %v1668
        %v1776 = vunpack.c.h.b16 %v1668
        %v1777 = vpack.c.b16 %v1715, %v1713
        %v1778 = vpack.c.b16 %v1716, %v1714
        %v1779 = vpack.c.b16 %v1719, %v1717
        %v1780 = vpack.c.b16 %v1720, %v1718
        %v1781 = vpack.c.b16 %v1723, %v1721
        %v1782 = vpack.c.b16 %v1724, %v1722
        %v1783 = vpack.c.b16 %v1727, %v1725
        %v1784 = vpack.c.b16 %v1728, %v1726
        %v1785 = vpack.c.b16 %v1731, %v1729
        %v1786 = vpack.c.b16 %v1732, %v1730
        %v1787 = vpack.c.b16 %v1735, %v1733
        %v1788 = vpack.c.b16 %v1736, %v1734
        %v1789 = vpack.c.b16 %v1739, %v1737
        %v1790 = vpack.c.b16 %v1740, %v1738
        %v1791 = vpack.c.b16 %v1743, %v1741
        %v1792 = vpack.c.b16 %v1744, %v1742
        %v1793 = vpack.c.b16 %v1747, %v1745
        %v1794 = vpack.c.b16 %v1748, %v1746
        %v1795 = vpack.c.b16 %v1751, %v1749
        %v1796 = vpack.c.b16 %v1752, %v1750
        %v1797 = vpack.c.b16 %v1755, %v1753
        %v1798 = vpack.c.b16 %v1756, %v1754
        %v1799 = vpack.c.b16 %v1759, %v1757
        %v1800 = vpack.c.b16 %v1760, %v1758
        %v1801 = vpack.c.b16 %v1763, %v1761
        %v1802 = vpack.c.b16 %v1764, %v1762
        %v1803 = vpack.c.b16 %v1767, %v1765
        %v1804 = vpack.c.b16 %v1768, %v1766
        %v1805 = vpack.c.b16 %v1771, %v1769
        %v1806 = vpack.c.b16 %v1772, %v1770
        %v1807 = vpack.c.b16 %v1775, %v1773
        %v1808 = vpack.c.b16 %v1776, %v1774
        %1841 = vmatprep.subr.bf16.mxu0 %v1792
        %1842 = vmatpush1.bf16.msra.mxu0 %v1791
        %1843 = vmatprep.subr.bf16.mxu0 %v1790
        %1844 = vmatpush1.bf16.msra.mxu0 %v1789
        %1845 = vmatprep.subr.bf16.mxu0 %v1788
        %1846 = vmatpush1.bf16.msra.mxu0 %v1787
        %1847 = vmatprep.subr.bf16.mxu0 %v1786
        %1848 = vmatpush1.bf16.msra.mxu0 %v1785
        %1849 = vmatprep.subr.bf16.mxu0 %v1784
        %1850 = vmatpush1.bf16.msra.mxu0 %v1783
        %1851 = vmatprep.subr.bf16.mxu0 %v1782
        %1852 = vmatpush1.bf16.msra.mxu0 %v1781
        %1853 = vmatprep.subr.bf16.mxu0 %v1780
        %1854 = vmatpush1.bf16.msra.mxu0 %v1779
        %1855 = vmatprep.subr.bf16.mxu0 %v1778
        %1856 = vmatpush1.bf16.msra.mxu0 %v1777
        %1857 = vmatprep.subr.bf16.mxu0 %v1808
        %1858 = vmatpush2.bf16.msra.mxu0 %v1807
        %1859 = vmatprep.subr.bf16.mxu0 %v1806
        %1860 = vmatpush2.bf16.msra.mxu0 %v1805
        %1861 = vmatprep.subr.bf16.mxu0 %v1804
        %1862 = vmatpush2.bf16.msra.mxu0 %v1803
        %1863 = vmatprep.subr.bf16.mxu0 %v1802
        %1864 = vmatpush2.bf16.msra.mxu0 %v1801
        %1865 = vmatprep.subr.bf16.mxu0 %v1800
        %1866 = vmatpush2.bf16.msra.mxu0 %v1799
        %1867 = vmatprep.subr.bf16.mxu0 %v1798
        %1868 = vmatpush2.bf16.msra.mxu0 %v1797
        %1869 = vmatprep.subr.bf16.mxu0 %v1796
        %1870 = vmatpush2.bf16.msra.mxu0 %v1795
        %1871 = vmatprep.subr.bf16.mxu0 %v1794
        %1872 = vmatpush2.bf16.msra.mxu0 %v1793
        %1873 = vmatprep.mubr.bf16.mxu0 %v1634
        %1874 = vmatmul.mubr.bf16.gmra.mxu0 %v1633
        %v1875 = vpop.f32.mrf.mxu0
        %v1876 = vadd.f32 %v1674, %v1875
        %v1877 = vpop.f32.mrf.mxu0
        %v1878 = vadd.f32 %v1678, %v1877
        %v1879 = vpop.f32.mrf.mxu0
        %v1880 = vadd.f32 %v1674, %v1879
        %v1881 = vpop.f32.mrf.mxu0
        %v1882 = vadd.f32 %v1678, %v1881
        %1883 = vmatprep.mubr.bf16.mxu0 %v1636
        %1884 = vmatmul.mubr.bf16.gmra.mxu0 %v1635
        %v1885 = vpop.f32.mrf.mxu0
        %v1886 = vadd.f32 %v1674, %v1885
        %v1887 = vpop.f32.mrf.mxu0
        %v1888 = vadd.f32 %v1678, %v1887
        %v1889 = vpop.f32.mrf.mxu0
        %v1890 = vadd.f32 %v1674, %v1889
        %v1891 = vpop.f32.mrf.mxu0
        %v1892 = vadd.f32 %v1678, %v1891
        %1893 = vdwg.mxu0
        %v1894 = vpack.c.bf16 %v1880, %v1876
        %v1895 = vpack.c.bf16 %v1882, %v1878
        %v1896 = vpack.c.bf16 %v1890, %v1886
        %v1897 = vpack.c.bf16 %v1892, %v1888
        %v1898 = vtanh.bf16.pop %v1894
        %v1899 = vtanh.bf16.pop %v1895
        %v1900 = vtanh.bf16.pop %v1896
        %v1901 = vtanh.bf16.pop %v1897
        %v1902 = vld [vmem:[#allocation8] sm:$0xff]
        %v1903 = vld [vmem:[#allocation8 + $0x8] sm:$0xff]
        %v1904 = vld [vmem:[#allocation8 + $0x10] sm:$0xff]
        %v1905 = vld [vmem:[#allocation8 + $0x18] sm:$0xff]
        %v1906 = vld [vmem:[#allocation8 + $0x20] sm:$0xff]
        %v1907 = vld [vmem:[#allocation8 + $0x28] sm:$0xff]
        %v1908 = vld [vmem:[#allocation8 + $0x30] sm:$0xff]
        %v1909 = vld [vmem:[#allocation8 + $0x38] sm:$0xff]
        %v1910 = vld [vmem:[#allocation8 + $0x40] sm:$0xff]
        %v1911 = vld [vmem:[#allocation8 + $0x48] sm:$0xff]
        %v1912 = vld [vmem:[#allocation8 + $0x50] sm:$0xff]
        %v1913 = vld [vmem:[#allocation8 + $0x58] sm:$0xff]
        %v1914 = vld [vmem:[#allocation8 + $0x60] sm:$0xff]
        %v1915 = vld [vmem:[#allocation8 + $0x68] sm:$0xff]
        %v1916 = vld [vmem:[#allocation8 + $0x70] sm:$0xff]
        %v1917 = vld [vmem:[#allocation8 + $0x78] sm:$0xff]
        %v1918 = vld [vmem:[#allocation8 + $0x80] sm:$0xff]
        %v1919 = vld [vmem:[#allocation8 + $0x88] sm:$0xff]
        %v1920 = vld [vmem:[#allocation8 + $0x90] sm:$0xff]
        %v1921 = vld [vmem:[#allocation8 + $0x98] sm:$0xff]
        %v1922 = vld [vmem:[#allocation8 + $0xa0] sm:$0xff]
        %v1923 = vld [vmem:[#allocation8 + $0xa8] sm:$0xff]
        %v1924 = vld [vmem:[#allocation8 + $0xb0] sm:$0xff]
        %v1925 = vld [vmem:[#allocation8 + $0xb8] sm:$0xff]
        %v1926 = vld [vmem:[#allocation8 + $0xc0] sm:$0xff]
        %v1927 = vld [vmem:[#allocation8 + $0xc8] sm:$0xff]
        %v1928 = vld [vmem:[#allocation8 + $0xd0] sm:$0xff]
        %v1929 = vld [vmem:[#allocation8 + $0xd8] sm:$0xff]
        %v1930 = vld [vmem:[#allocation8 + $0xe0] sm:$0xff]
        %v1931 = vld [vmem:[#allocation8 + $0xe8] sm:$0xff]
        %v1932 = vld [vmem:[#allocation8 + $0xf0] sm:$0xff]
        %v1933 = vld [vmem:[#allocation8 + $0xf8] sm:$0xff]
        %v1934 = vld [vmem:[%s13] sm:$0x3]
        %v1936 = vlaneseq
        %v1937 = vshrl.u32 %v1936, 7
        %v1938 = vsub.s32 0, %v1937
        %v1939 = vrot.slane %v1934, %v1938
        %v1940 = vlaneseq
        %v1941 = vshrl.u32 %v1940, 7
        %v1942 = vsub.s32 1, %v1941
        %v1943 = vrot.slane %v1934, %v1942
        %v1978 = vunpack.c.l.b16 %v1902
        %v1979 = vunpack.c.h.b16 %v1902
        %v1980 = vunpack.c.l.b16 %v1903
        %v1981 = vunpack.c.h.b16 %v1903
        %v1982 = vunpack.c.l.b16 %v1904
        %v1983 = vunpack.c.h.b16 %v1904
        %v1984 = vunpack.c.l.b16 %v1905
        %v1985 = vunpack.c.h.b16 %v1905
        %v1986 = vunpack.c.l.b16 %v1906
        %v1987 = vunpack.c.h.b16 %v1906
        %v1988 = vunpack.c.l.b16 %v1907
        %v1989 = vunpack.c.h.b16 %v1907
        %v1990 = vunpack.c.l.b16 %v1908
        %v1991 = vunpack.c.h.b16 %v1908
        %v1992 = vunpack.c.l.b16 %v1909
        %v1993 = vunpack.c.h.b16 %v1909
        %v1994 = vunpack.c.l.b16 %v1910
        %v1995 = vunpack.c.h.b16 %v1910
        %v1996 = vunpack.c.l.b16 %v1911
        %v1997 = vunpack.c.h.b16 %v1911
        %v1998 = vunpack.c.l.b16 %v1912
        %v1999 = vunpack.c.h.b16 %v1912
        %v2000 = vunpack.c.l.b16 %v1913
        %v2001 = vunpack.c.h.b16 %v1913
        %v2002 = vunpack.c.l.b16 %v1914
        %v2003 = vunpack.c.h.b16 %v1914
        %v2004 = vunpack.c.l.b16 %v1915
        %v2005 = vunpack.c.h.b16 %v1915
        %v2006 = vunpack.c.l.b16 %v1916
        %v2007 = vunpack.c.h.b16 %v1916
        %v2008 = vunpack.c.l.b16 %v1917
        %v2009 = vunpack.c.h.b16 %v1917
        %v2010 = vunpack.c.l.b16 %v1918
        %v2011 = vunpack.c.h.b16 %v1918
        %v2012 = vunpack.c.l.b16 %v1919
        %v2013 = vunpack.c.h.b16 %v1919
        %v2014 = vunpack.c.l.b16 %v1920
        %v2015 = vunpack.c.h.b16 %v1920
        %v2016 = vunpack.c.l.b16 %v1921
        %v2017 = vunpack.c.h.b16 %v1921
        %v2018 = vunpack.c.l.b16 %v1922
        %v2019 = vunpack.c.h.b16 %v1922
        %v2020 = vunpack.c.l.b16 %v1923
        %v2021 = vunpack.c.h.b16 %v1923
        %v2022 = vunpack.c.l.b16 %v1924
        %v2023 = vunpack.c.h.b16 %v1924
        %v2024 = vunpack.c.l.b16 %v1925
        %v2025 = vunpack.c.h.b16 %v1925
        %v2026 = vunpack.c.l.b16 %v1926
        %v2027 = vunpack.c.h.b16 %v1926
        %v2028 = vunpack.c.l.b16 %v1927
        %v2029 = vunpack.c.h.b16 %v1927
        %v2030 = vunpack.c.l.b16 %v1928
        %v2031 = vunpack.c.h.b16 %v1928
        %v2032 = vunpack.c.l.b16 %v1929
        %v2033 = vunpack.c.h.b16 %v1929
        %v2034 = vunpack.c.l.b16 %v1930
        %v2035 = vunpack.c.h.b16 %v1930
        %v2036 = vunpack.c.l.b16 %v1931
        %v2037 = vunpack.c.h.b16 %v1931
        %v2038 = vunpack.c.l.b16 %v1932
        %v2039 = vunpack.c.h.b16 %v1932
        %v2040 = vunpack.c.l.b16 %v1933
        %v2041 = vunpack.c.h.b16 %v1933
        %v2042 = vpack.c.b16 %v1980, %v1978
        %v2043 = vpack.c.b16 %v1981, %v1979
        %v2044 = vpack.c.b16 %v1984, %v1982
        %v2045 = vpack.c.b16 %v1985, %v1983
        %v2046 = vpack.c.b16 %v1988, %v1986
        %v2047 = vpack.c.b16 %v1989, %v1987
        %v2048 = vpack.c.b16 %v1992, %v1990
        %v2049 = vpack.c.b16 %v1993, %v1991
        %v2050 = vpack.c.b16 %v1996, %v1994
        %v2051 = vpack.c.b16 %v1997, %v1995
        %v2052 = vpack.c.b16 %v2000, %v1998
        %v2053 = vpack.c.b16 %v2001, %v1999
        %v2054 = vpack.c.b16 %v2004, %v2002
        %v2055 = vpack.c.b16 %v2005, %v2003
        %v2056 = vpack.c.b16 %v2008, %v2006
        %v2057 = vpack.c.b16 %v2009, %v2007
        %v2058 = vpack.c.b16 %v2012, %v2010
        %v2059 = vpack.c.b16 %v2013, %v2011
        %v2060 = vpack.c.b16 %v2016, %v2014
        %v2061 = vpack.c.b16 %v2017, %v2015
        %v2062 = vpack.c.b16 %v2020, %v2018
        %v2063 = vpack.c.b16 %v2021, %v2019
        %v2064 = vpack.c.b16 %v2024, %v2022
        %v2065 = vpack.c.b16 %v2025, %v2023
        %v2066 = vpack.c.b16 %v2028, %v2026
        %v2067 = vpack.c.b16 %v2029, %v2027
        %v2068 = vpack.c.b16 %v2032, %v2030
        %v2069 = vpack.c.b16 %v2033, %v2031
        %v2070 = vpack.c.b16 %v2036, %v2034
        %v2071 = vpack.c.b16 %v2037, %v2035
        %v2072 = vpack.c.b16 %v2040, %v2038
        %v2073 = vpack.c.b16 %v2041, %v2039
        %2106 = vmatprep.subr.bf16.mxu0 %v2057
        %2107 = vmatpush1.bf16.msra.mxu0 %v2056
        %2108 = vmatprep.subr.bf16.mxu0 %v2055
        %2109 = vmatpush1.bf16.msra.mxu0 %v2054
        %2110 = vmatprep.subr.bf16.mxu0 %v2053
        %2111 = vmatpush1.bf16.msra.mxu0 %v2052
        %2112 = vmatprep.subr.bf16.mxu0 %v2051
        %2113 = vmatpush1.bf16.msra.mxu0 %v2050
        %2114 = vmatprep.subr.bf16.mxu0 %v2049
        %2115 = vmatpush1.bf16.msra.mxu0 %v2048
        %2116 = vmatprep.subr.bf16.mxu0 %v2047
        %2117 = vmatpush1.bf16.msra.mxu0 %v2046
        %2118 = vmatprep.subr.bf16.mxu0 %v2045
        %2119 = vmatpush1.bf16.msra.mxu0 %v2044
        %2120 = vmatprep.subr.bf16.mxu0 %v2043
        %2121 = vmatpush1.bf16.msra.mxu0 %v2042
        %2122 = vmatprep.subr.bf16.mxu0 %v2073
        %2123 = vmatpush2.bf16.msra.mxu0 %v2072
        %2124 = vmatprep.subr.bf16.mxu0 %v2071
        %2125 = vmatpush2.bf16.msra.mxu0 %v2070
        %2126 = vmatprep.subr.bf16.mxu0 %v2069
        %2127 = vmatpush2.bf16.msra.mxu0 %v2068
        %2128 = vmatprep.subr.bf16.mxu0 %v2067
        %2129 = vmatpush2.bf16.msra.mxu0 %v2066
        %2130 = vmatprep.subr.bf16.mxu0 %v2065
        %2131 = vmatpush2.bf16.msra.mxu0 %v2064
        %2132 = vmatprep.subr.bf16.mxu0 %v2063
        %2133 = vmatpush2.bf16.msra.mxu0 %v2062
        %2134 = vmatprep.subr.bf16.mxu0 %v2061
        %2135 = vmatpush2.bf16.msra.mxu0 %v2060
        %2136 = vmatprep.subr.bf16.mxu0 %v2059
        %2137 = vmatpush2.bf16.msra.mxu0 %v2058
        %2138 = vmatprep.mubr.bf16.mxu0 %v1899
        %2139 = vmatmul.mubr.bf16.gmra.mxu0 %v1898
        %v2140 = vpop.f32.mrf.mxu0
        %v2141 = vadd.f32 %v1939, %v2140
        %v2142 = vpop.f32.mrf.mxu0
        %v2143 = vadd.f32 %v1943, %v2142
        %v2144 = vpop.f32.mrf.mxu0
        %v2145 = vadd.f32 %v1939, %v2144
        %v2146 = vpop.f32.mrf.mxu0
        %v2147 = vadd.f32 %v1943, %v2146
        %2148 = vmatprep.mubr.bf16.mxu0 %v1901
        %2149 = vmatmul.mubr.bf16.gmra.mxu0 %v1900
        %v2150 = vpop.f32.mrf.mxu0
        %v2151 = vadd.f32 %v1939, %v2150
        %v2152 = vpop.f32.mrf.mxu0
        %v2153 = vadd.f32 %v1943, %v2152
        %v2154 = vpop.f32.mrf.mxu0
        %v2155 = vadd.f32 %v1939, %v2154
        %v2156 = vpop.f32.mrf.mxu0
        %v2157 = vadd.f32 %v1943, %v2156
        %2158 = vdwg.mxu0
        %v2159 = vpack.c.bf16 %v2145, %v2141
        %v2160 = vpack.c.bf16 %v2147, %v2143
        %v2161 = vpack.c.bf16 %v2155, %v2151
        %v2162 = vpack.c.bf16 %v2157, %v2153
        %v2163 = vxor.u32 %v2159, 2147516416
        %v2164 = vxor.u32 %v2160, 2147516416
        %v2165 = vxor.u32 %v2161, 2147516416
        %v2166 = vxor.u32 %v2162, 2147516416
        %v2168 = vmul.bf16 %v2163, 1069105081
        %v2169 = vpow.bf16.pop %v2168
        %v2171 = vmul.bf16 %v2164, 1069105081
        %v2172 = vpow.bf16.pop %v2171
        %v2174 = vmul.bf16 %v2165, 1069105081
        %v2175 = vpow.bf16.pop %v2174
        %v2177 = vmul.bf16 %v2166, 1069105081
        %v2178 = vpow.bf16.pop %v2177
        %v2179 = vadd.bf16 %v2169, 1065369472
        %v2180 = vadd.bf16 %v2172, 1065369472
        %v2181 = vadd.bf16 %v2175, 1065369472
        %v2182 = vadd.bf16 %v2178, 1065369472
        %v2183 = vrcp.bf16.pop %v2179
        %v2184 = vmul.bf16 1065369472, %v2183
        %v2185 = vrcp.bf16.pop %v2180
        %v2186 = vmul.bf16 1065369472, %v2185
        %v2187 = vrcp.bf16.pop %v2181
        %v2188 = vmul.bf16 1065369472, %v2187
        %v2189 = vrcp.bf16.pop %v2182
        %v2190 = vmul.bf16 1065369472, %v2189
        %vm2191 = vcmask 64512
        %2192 = vst.msk [vmem:[%s592] sm:$0xff] %vm2191, %v1356
        %2193 = vst.msk [vmem:[%s592 + $0x8] sm:$0xff] %vm2191, %v1359
        %2194 = vst.msk [vmem:[%s592 + $0x10] sm:$0xff] %vm2191, %v1364
        %2195 = vst.msk [vmem:[%s592 + $0x18] sm:$0xff] %vm2191, %v1367
        %2196 = vrot.lane.b32.xlu0 %v1406, 8
        %v2197 = vpop.permute.xlu0 %2196
        %2198 = vrot.lane.b32.xlu0 %v1407, 8
        %v2199 = vpop.permute.xlu0 %2198
        %2200 = vrot.lane.b32.xlu0 %v1408, 8
        %v2201 = vpop.permute.xlu0 %2200
        %2202 = vrot.lane.b32.xlu0 %v1409, 8
        %v2203 = vpop.permute.xlu0 %2202
        %vm2208 = vcmask 97344
        %2209 = vst.msk [vmem:[%s592] sm:$0xff] %vm2208, %v2197
        %2210 = vst.msk [vmem:[%s592 + $0x8] sm:$0xff] %vm2208, %v2199
        %2211 = vst.msk [vmem:[%s592 + $0x10] sm:$0xff] %vm2208, %v2201
        %2212 = vst.msk [vmem:[%s592 + $0x18] sm:$0xff] %vm2208, %v2203
        %vm2213 = vcmask 130144
        %2214 = vst.msk [vmem:[%s592] sm:$0xff] %vm2213, 0.0
        %2215 = vst.msk [vmem:[%s592 + $0x8] sm:$0xff] %vm2213, 0.0
        %2216 = vst.msk [vmem:[%s592 + $0x10] sm:$0xff] %vm2213, 0.0
        %2217 = vst.msk [vmem:[%s592 + $0x18] sm:$0xff] %vm2213, 0.0
        %v2222 = vunpack.c.l.b16 %v2184
        %v2223 = vunpack.c.l.b16 %v2186
        %v2224 = vunpack.c.h.b16 %v2184
        %v2225 = vunpack.c.h.b16 %v2186
        %v2226 = vunpack.c.l.b16 %v2188
        %v2227 = vunpack.c.l.b16 %v2190
        %v2228 = vunpack.c.h.b16 %v2188
        %v2229 = vunpack.c.h.b16 %v2190
        %v2230 = vpack.c.b16 %v2223, %v2222
        %v2231 = vpack.c.b16 %v2225, %v2224
        %v2232 = vpack.c.b16 %v2227, %v2226
        %v2233 = vpack.c.b16 %v2229, %v2228
        %2238 = vst [vmem:[%s599] sm:$0xff] %v2230
        %2239 = vst [vmem:[%s599 + $0x8] sm:$0xff] %v2231
        %2240 = vst [vmem:[%s599 + $0x10] sm:$0xff] %v2232
        %2241 = vst [vmem:[%s599 + $0x18] sm:$0xff] %v2233
        %s2242 = sand.u32 %s345, 1
        %s2243 = sand.u32 %s345, 1
        %s2244 = smul.addr %s2243, 32
        %s2245 = scalar_lea.vmem [#allocation10], %s2244
        %s2246 = sand.u32 %s371, 1
        %s2247 = scalar_lea.sflag [#allocation4], %s2246
        %s2248 = sand.u32 %s371, 1
        %s2249 = smul.addr %s2248, 32
        %s2250 = scalar_lea.vmem [#allocation11], %s2249
        // Predicated region
        $region93: #{tpu_custom_call.1} parent=75 // pred_check
          %p2251 = pneg %p355
        $region94: #{tpu_custom_call.1} parent=75 // pred_check_branch
          %2253 = sbr.rel (%p2251) target = $region96
        $region95: #{tpu_custom_call.1} parent=75 // pred_region
          %s2254 = smul.u32 4, %s33
          %s2255 = ssub.s32 5, %s2254
          %p2256 = scmp.lt.s32.totalorder %s2255, 4
          %s2257 = scalar_select %p2256, %s2255, 4
          %s2258 = smul.u32 128, %s2257
          %p2259 = scmp.ne.s32.totalorder 0, %s2258
          %s2260 = smul.addr %s2254, 8
          %s2261 = scalar_lea.vmem %s14, %s2260
          // Predicated region
          $region97: #{tpu_custom_call.1} parent=95 // pred_check
            %p2262 = pneg %p2259
          $region98: #{tpu_custom_call.1} parent=95 // pred_check_branch
            %2264 = sbr.rel (%p2262) target = $region100
          $region99: #{tpu_custom_call.1} parent=95 // pred_region
            // Predicated region
            $region101: #{tpu_custom_call.1} parent=99 // pred_check
              _
            $region102: #{tpu_custom_call.1} parent=99 // pred_check_branch
              %2266 = sbr.rel (0) target = $region104
            $region103: #{tpu_custom_call.1} parent=99 // pred_region
              // Predicated region
              $region123: #{tpu_custom_call.1} parent=103 // pred_check
                _
              $region124: #{tpu_custom_call.1} parent=103 // pred_check_branch
                %2322 = sbr.rel (0) target = $region126
              $region125: #{tpu_custom_call.1} parent=103 // pred_region
                %s2323 = sshrl.u32 %s2257, 2
                // While loop
                $region127: #{tpu_custom_call.1} parent=125 // loop_pre_header
                  _
                $region128: #{tpu_custom_call.1} parent=125 // loop_header
                  %s2325 = sphi 0, %s2327
                  %p2326 = scmp.ge.s32.totalorder %s2325, %s2323
                  %s2330 = sphi 0, %s2343
                  %s2331 = sphi %s2245, %s2346
                  %s2332 = sphi %s2261, %s2347
                $region129: #{tpu_custom_call.1} parent=125 // loop_header_branch
                  %2329 = sbr.rel (%p2326) target = $region133
                $region130: #{tpu_custom_call.1} parent=125 // loop_body
                  %v2333 = vld [vmem:[%s2331] sm:$0xff]
                  %2334 = vst [vmem:[%s2332] sm:$0xff] %v2333
                  %v2335 = vld [vmem:[%s2331 + $0x8] sm:$0xff]
                  %2336 = vst [vmem:[%s2332 + $0x8] sm:$0xff] %v2335
                  %v2337 = vld [vmem:[%s2331 + $0x10] sm:$0xff]
                  %2338 = vst [vmem:[%s2332 + $0x10] sm:$0xff] %v2337
                  %v2339 = vld [vmem:[%s2331 + $0x18] sm:$0xff]
                  %2340 = vst [vmem:[%s2332 + $0x18] sm:$0xff] %v2339
                  %s2341 = sadd.s32 1, %s2330
                  %p2342 = scmp.ge.s32.totalorder %s2341, %s2323
                  %s2343 = scalar_select %p2342, 0, %s2341
                  %s2344 = smul.u32 %s2343, 32
                  %s2345 = smul.u32 %s2343, 32
                  %s2346 = scalar_lea.vmem %s2245, %s2344 [#allocation10]
                  %s2347 = scalar_lea.vmem %s2261, %s2345
                $region131: #{tpu_custom_call.1} parent=125 // loop_footer
                  %s2327 = sadd.s32 %s2325, 1
                $region132: #{tpu_custom_call.1} parent=125 // loop_footer_branch
                  %2324 = sbr.rel target = $region128
                $region133: #{tpu_custom_call.1} parent=125 // loop_exit
                  _
                %s2348 = sshrl.u32 %s2257, 2
                %s2349 = sand.u32 %s2257, 3
                %s2350 = smul.u32 %s2348, 4
                %s2351 = smul.u32 8, %s2350
                %s2352 = scalar_lea.vmem %s2245, %s2351 [#allocation10]
                %s2353 = smul.u32 8, %s2350
                %s2354 = scalar_lea.vmem %s2261, %s2353
                // While loop
                $region134: #{tpu_custom_call.1} parent=125 // loop_pre_header
                  _
                $region135: #{tpu_custom_call.1} parent=125 // loop_header
                  %s2356 = sphi 0, %s2358
                  %p2357 = scmp.ge.s32.totalorder %s2356, %s2349
                  %s2361 = sphi 0, %s2368
                  %s2362 = sphi %s2352, %s2371
                  %s2363 = sphi %s2354, %s2372
                $region136: #{tpu_custom_call.1} parent=125 // loop_header_branch
                  %2360 = sbr.rel (%p2357) target = $region140
                $region137: #{tpu_custom_call.1} parent=125 // loop_body
                  %v2364 = vld [vmem:[%s2362] sm:$0xff]
                  %2365 = vst [vmem:[%s2363] sm:$0xff] %v2364
                  %s2366 = sadd.s32 1, %s2361
                  %p2367 = scmp.ge.s32.totalorder %s2366, %s2349
                  %s2368 = scalar_select %p2367, 0, %s2366
                  %s2369 = smul.u32 %s2368, 8
                  %s2370 = smul.u32 %s2368, 8
                  %s2371 = scalar_lea.vmem %s2352, %s2369 [#allocation10]
                  %s2372 = scalar_lea.vmem %s2354, %s2370
                $region138: #{tpu_custom_call.1} parent=125 // loop_footer
                  %s2358 = sadd.s32 %s2356, 1
                $region139: #{tpu_custom_call.1} parent=125 // loop_footer_branch
                  %2355 = sbr.rel target = $region135
                $region140: #{tpu_custom_call.1} parent=125 // loop_exit
                  _
              $region126: #{tpu_custom_call.1} parent=103 // pred_fallthru
                _
              // Predicated region
              $region141: #{tpu_custom_call.1} parent=103 // pred_check
                _
              $region142: #{tpu_custom_call.1} parent=103 // pred_check_branch
                %2374 = sbr.rel target = $region144
              $region143: #{tpu_custom_call.1} parent=103 // pred_region
                _
              $region144: #{tpu_custom_call.1} parent=103 // pred_fallthru
                _
            $region104: #{tpu_custom_call.1} parent=99 // pred_fallthru
              _
            // Predicated region
            $region105: #{tpu_custom_call.1} parent=99 // pred_check
              _
            $region106: #{tpu_custom_call.1} parent=99 // pred_check_branch
              %2268 = sbr.rel target = $region108
            $region107: #{tpu_custom_call.1} parent=99 // pred_region
              %s2270 = ssub.s32 256, 1
              %s2271 = sshrl.u32 %s2257, 2
              // While loop
              $region109: #{tpu_custom_call.1} parent=107 // loop_pre_header
                _
              $region110: #{tpu_custom_call.1} parent=107 // loop_header
                %s2273 = sphi 0, %s2275
                %p2274 = scmp.ge.s32.totalorder %s2273, %s2271
                %s2278 = sphi 0, %s2291
                %s2279 = sphi %s2245, %s2294
                %s2280 = sphi %s2261, %s2295
              $region111: #{tpu_custom_call.1} parent=107 // loop_header_branch
                %2277 = sbr.rel (%p2274) target = $region115
              $region112: #{tpu_custom_call.1} parent=107 // loop_body
                %v2281 = vld [vmem:[%s2279] sm:%s2270]
                %2282 = vst [vmem:[%s2280] sm:%s2270] %v2281
                %v2283 = vld [vmem:[%s2279 + $0x8] sm:%s2270]
                %2284 = vst [vmem:[%s2280 + $0x8] sm:%s2270] %v2283
                %v2285 = vld [vmem:[%s2279 + $0x10] sm:%s2270]
                %2286 = vst [vmem:[%s2280 + $0x10] sm:%s2270] %v2285
                %v2287 = vld [vmem:[%s2279 + $0x18] sm:%s2270]
                %2288 = vst [vmem:[%s2280 + $0x18] sm:%s2270] %v2287
                %s2289 = sadd.s32 1, %s2278
                %p2290 = scmp.ge.s32.totalorder %s2289, %s2271
                %s2291 = scalar_select %p2290, 0, %s2289
                %s2292 = smul.u32 %s2291, 32
                %s2293 = smul.u32 %s2291, 32
                %s2294 = scalar_lea.vmem %s2245, %s2292 [#allocation10]
                %s2295 = scalar_lea.vmem %s2261, %s2293
              $region113: #{tpu_custom_call.1} parent=107 // loop_footer
                %s2275 = sadd.s32 %s2273, 1
              $region114: #{tpu_custom_call.1} parent=107 // loop_footer_branch
                %2272 = sbr.rel target = $region110
              $region115: #{tpu_custom_call.1} parent=107 // loop_exit
                _
              %s2296 = sshrl.u32 %s2257, 2
              %s2297 = sand.u32 %s2257, 3
              %s2298 = smul.u32 %s2296, 4
              %s2299 = smul.u32 8, %s2298
              %s2300 = scalar_lea.vmem %s2245, %s2299 [#allocation10]
              %s2301 = smul.u32 8, %s2298
              %s2302 = scalar_lea.vmem %s2261, %s2301
              // While loop
              $region116: #{tpu_custom_call.1} parent=107 // loop_pre_header
                _
              $region117: #{tpu_custom_call.1} parent=107 // loop_header
                %s2304 = sphi 0, %s2306
                %p2305 = scmp.ge.s32.totalorder %s2304, %s2297
                %s2309 = sphi 0, %s2316
                %s2310 = sphi %s2300, %s2319
                %s2311 = sphi %s2302, %s2320
              $region118: #{tpu_custom_call.1} parent=107 // loop_header_branch
                %2308 = sbr.rel (%p2305) target = $region122
              $region119: #{tpu_custom_call.1} parent=107 // loop_body
                %v2312 = vld [vmem:[%s2310] sm:%s2270]
                %2313 = vst [vmem:[%s2311] sm:%s2270] %v2312
                %s2314 = sadd.s32 1, %s2309
                %p2315 = scmp.ge.s32.totalorder %s2314, %s2297
                %s2316 = scalar_select %p2315, 0, %s2314
                %s2317 = smul.u32 %s2316, 8
                %s2318 = smul.u32 %s2316, 8
                %s2319 = scalar_lea.vmem %s2300, %s2317 [#allocation10]
                %s2320 = scalar_lea.vmem %s2302, %s2318
              $region120: #{tpu_custom_call.1} parent=107 // loop_footer
                %s2306 = sadd.s32 %s2304, 1
              $region121: #{tpu_custom_call.1} parent=107 // loop_footer_branch
                %2303 = sbr.rel target = $region117
              $region122: #{tpu_custom_call.1} parent=107 // loop_exit
                _
            $region108: #{tpu_custom_call.1} parent=99 // pred_fallthru
              _
          $region100: #{tpu_custom_call.1} parent=95 // pred_fallthru
            _
          %2375 = vnop
        $region96: #{tpu_custom_call.1} parent=75 // pred_fallthru
          _
        // Predicated region
        $region145: #{tpu_custom_call.1} parent=75 // pred_check
          %p2376 = pneg %p381
        $region146: #{tpu_custom_call.1} parent=75 // pred_check_branch
          %2378 = sbr.rel (%p2376) target = $region148
        $region147: #{tpu_custom_call.1} parent=75 // pred_region
          %s2379 = smul.u32 4, %s33
          %s2380 = ssub.s32 5, %s2379
          %p2381 = scmp.lt.s32.totalorder %s2380, 4
          %s2382 = scalar_select %p2381, %s2380, 4
          %s2383 = smul.u32 64, %s2382
          %s2384 = smul.u32 %s2383, 2
          %s2386 = ssub.s32 512, %s2384
          %2387 = vsyncadd %s2247, %s2386
          %p2388 = scmp.ne.s32.totalorder 0, %s2384
          %s2389 = smul.addr %s2379, 2
          %s2390 = smul.addr %s2389, 64
          %s2391 = scalar_lea.hbm %s15, %s2390
          %s2392 = smul.u32 8, %s2382
          %s2393 = sshll.u32 %s2250, 4
          %s2394 = int_to_ptr.vmem [resolvable:$true] %s2393
          %s2395 = sshll.u32 %s2392, 4
          %2399 = dma.vmem_to_hbm [thread:$0]  (%p2388), %s2394, %s2395, %s2391, %s2247, 128, 128, 8
        $region148: #{tpu_custom_call.1} parent=75 // pred_fallthru
          _
      $region76: #{tpu_custom_call.1} parent=5 // pred_fallthru
        _
      %p2400 = scmp.le.s32.totalorder 2, %s28
      // Predicated region
      $region149: #{tpu_custom_call.1} parent=5 // pred_check
        %p2401 = pneg %p2400
      $region150: #{tpu_custom_call.1} parent=5 // pred_check_branch
        %2403 = sbr.rel (%p2401) target = $region152
      $region151: #{tpu_custom_call.1} parent=5 // pred_region
        %s2404 = ssub.s32 %s28, 2
        // Predicated region
        $region153: #{tpu_custom_call.1} parent=151 // pred_check
          %p2405 = pneg %p361
        $region154: #{tpu_custom_call.1} parent=151 // pred_check_branch
          %2407 = sbr.rel (%p2405) target = $region156
        $region155: #{tpu_custom_call.1} parent=151 // pred_region
          %s2408 = sand.u32 %s346, 1
          %s2409 = sand.u32 %s346, 1
          %s2410 = smul.addr %s2409, 32
          %s2411 = scalar_lea.vmem [#allocation10], %s2410
        $region156: #{tpu_custom_call.1} parent=151 // pred_fallthru
          _
        // Predicated region
        $region157: #{tpu_custom_call.1} parent=151 // pred_check
          %p2412 = pneg %p387
        $region158: #{tpu_custom_call.1} parent=151 // pred_check_branch
          %2414 = sbr.rel (%p2412) target = $region160
        $region159: #{tpu_custom_call.1} parent=151 // pred_region
          %s2415 = sand.u32 %s372, 1
          %s2416 = scalar_lea.sflag [#allocation4], %s2415
          %s2417 = sand.u32 %s372, 1
          %s2418 = smul.addr %s2417, 32
          %s2419 = scalar_lea.vmem [#allocation11], %s2418
          %2420 = dma.done %s2416, 512
        $region160: #{tpu_custom_call.1} parent=151 // pred_fallthru
          _
      $region152: #{tpu_custom_call.1} parent=5 // pred_fallthru
        _
    $region6: #{tpu_custom_call.1} parent=1 // loop_footer
      %s32 = sadd.s32 1, %s28
    $region7: #{tpu_custom_call.1} parent=1 // loop_footer_branch
      %27 = sbr.rel target = $region3
    $region8: #{tpu_custom_call.1} parent=1 // loop_exit
      _
    %2421 = vsyncpa [#allocation3], 1
    %s2422 = scalar_lea.sflag [#allocation3], 1
    %2423 = vsyncpa %s2422, 1
    %2424 = vsyncpa [#allocation6], 1
    %2425 = vsyncpa [#allocation9], 1
    %2426 = vsyncpa [#allocation4], 1
    %s2427 = scalar_lea.sflag [#allocation4], 1
    %2428 = vsyncpa %s2427, 1

</llo_original>
